<compile_context>
chip_gen: v7x
topology: tpu7x:2x2x1
jax: 0.10.0
libtpu: 0.0.40
codegen_flags: <defaults>
</compile_context>

<pallas_src>
import functools

import jax
import jax.numpy as jnp
from jax.experimental import pallas as pl
from jax.experimental.pallas import tpu as pltpu


def _vmem_limit_bytes():
    # Raise the scoped-VMEM cap above the 16/32 MiB defaults while staying comfortably under
    # the physical VMEM of the current generation (128 MiB v5e/v6e, 64 MiB v7x).
    try:
        cap = int(pltpu.get_tpu_info().vmem_capacity_bytes)
        return min(96 * 1024 * 1024, (cap * 3) // 4)
    except Exception:
        return 64 * 1024 * 1024


def _pick_oh_tile(oh, ow, co):
    """OH tile such that the f32 matmul result block (m_rows x Co) stays <= ~128 KiB (half the
    vreg file) while keeping m_rows a multiple of 8 (and >= 256 when possible) so the MXU M dim
    stays filled and the output block store is layout-legal."""
    max_rows = max(256, (128 * 1024) // (4 * max(co, 1)))
    if oh * ow <= max_rows:
        return oh                                   # single tile: block == full OH extent
    t = max(8, ((max_rows // ow) // 8) * 8)         # multiple of 8 for the block constraint
    return min(t, oh)


def _cond_conv_kernel(gate_ref, wexp_ref, xp_ref, o_ref, w_mix_ref, *,
                      k, stride, dilation, oh_tile, ow_n, num_experts):
    """Fused CondConv step for one (sample, OH-tile) grid point.

    gate_ref : (1, E, 1, 1) f32        per-sample expert gate = sigmoid(fc(mean(x)))
    wexp_ref : (E, K*K*Ci, Co)         expert weights in im2col layout, VMEM-resident
    xp_ref   : (1, Hp, Wp, Ci)         zero-padded NHWC sample, resident across OH tiles
    o_ref    : (1, oh_tile*OW, Co)     output tile (compute dtype)
    w_mix_ref: (K*K*Ci, Co) scratch    per-sample mixed weight (persists across OH tiles)
    """
    t = pl.program_id(1)

    # Mix the expert weights for this sample once, on its first OH tile.  Gate stays f32 and
    # the sum over experts accumulates in f32; a single rounding to the compute dtype happens
    # when writing the MXU-operand scratch.
    @pl.when(t == 0)
    def _():
        mixed = gate_ref[0, 0] * wexp_ref[0]
        for e_i in range(1, num_experts):            # static unroll over experts
            mixed = mixed + gate_ref[0, e_i] * wexp_ref[e_i]
        w_mix_ref[...] = mixed.astype(w_mix_ref.dtype)

    oh0 = t * oh_tile
    m_rows = oh_tile * ow_n

    # im2col patch for this tile, loaded directly from the input ref (no intermediate slab),
    # then ONE (m_rows, K*K*Ci) x (K*K*Ci, Co) MXU dot so accumulation stays inside the MXU.
    patches = []
    for kh in range(k):                               # static K*K unroll
        for kw in range(k):
            r0 = oh0 * stride + kh * dilation         # dynamic start only on the major H dim
            c0 = kw * dilation                        # static start on the sublane W dim
            if stride == 1:
                p = xp_ref[0, pl.ds(r0, oh_tile), pl.ds(c0, ow_n), :]
            else:
                raw = xp_ref[0, pl.ds(r0, (oh_tile - 1) * stride + 1),
                             pl.ds(c0, (ow_n - 1) * stride + 1), :]
                p = jax.lax.slice(raw, (0, 0, 0), raw.shape, (stride, stride, 1))
            patches.append(p)                         # (oh_tile, OW, Ci)
    im2col = jnp.concatenate(patches, axis=-1)        # (oh_tile, OW, K*K*Ci)
    im2col = im2col.reshape(m_rows, im2col.shape[-1])
    acc = jnp.dot(im2col, w_mix_ref[...],
                  preferred_element_type=jnp.float32)  # (m_rows, Co), f32 accumulate
    o_ref[0] = acc.astype(o_ref.dtype)                 # single block store per tile


def cond_conv2d(x, expert_weight, fc_w, fc_b, *, num_experts, out_channels,
                kernel_size, stride=1, padding=0, dilation=1, groups=1,
                compute_dtype=jnp.bfloat16):
    """CondConv2d forward. x: (N, Ci, H, W) -> (N, Co, OH, OW), returned in x.dtype."""
    # TODO(synk): grouped conv (groups > 1) not implemented in the Pallas path.
    assert groups == 1
    n, ci, h, w = x.shape
    e, co, k = num_experts, out_channels, kernel_size
    kkci = k * k * ci
    oh = (h + 2 * padding - dilation * (k - 1) - 1) // stride + 1
    ow = (w + 2 * padding - dilation * (k - 1) - 1) // stride + 1

    # Expert weights pre-permuted ONCE to im2col layout (E, Kh*Kw*Ci, Co); kept resident in
    # VMEM via a constant index_map below.
    # TODO(synk): chunk this block over the K*K*Ci axis when E*D is too large for v7x's 64 MiB.
    w_exp = (expert_weight.reshape(e, co, ci, k, k)
             .transpose(0, 3, 4, 2, 1)
             .reshape(e, kkci, co)
             .astype(compute_dtype))

    # Tiny gating math (spatial mean + FC + sigmoid) stays in XLA and in f32; only the
    # E*D-sized expert mixing happens in-kernel, so there is no (N, D) HBM intermediate.
    avg = jnp.mean(x.astype(jnp.float32), axis=(2, 3))                         # (N, Ci)
    gate = jax.nn.sigmoid(avg @ fc_w.T.astype(jnp.float32)
                          + fc_b.astype(jnp.float32))                          # (N, E) f32
    gate = gate.reshape(n, e, 1, 1)

    oh_tile = _pick_oh_tile(oh, ow, co)
    n_t = pl.cdiv(oh, oh_tile)

    # NHWC + zero pad; extra bottom rows keep the (possibly ragged) last OH tile's input reads
    # in bounds -- Pallas drops that tile's out-of-range output rows on writeback.
    # TODO(synk): fold the zero-padding into the kernel and keep activations NHWC end-to-end to
    # drop these wrapper-side HBM passes when the surrounding model allows it.
    x_nhwc = jnp.transpose(x, (0, 2, 3, 1)).astype(compute_dtype)
    rows_needed = (n_t * oh_tile - 1) * stride + (k - 1) * dilation + 1
    pad_bot = padding + max(0, rows_needed - (h + 2 * padding))
    xp = jnp.pad(x_nhwc, ((0, 0), (padding, pad_bot), (padding, padding), (0, 0)))
    hp, wp = h + padding + pad_bot, w + 2 * padding

    # TODO(synk): for very large feature maps, tile OH on the INPUT too with halo DMAs
    # (manual make_async_copy) to bound the resident sample block under v7x's scoped limit.
    kernel = functools.partial(
        _cond_conv_kernel, k=k, stride=stride, dilation=dilation,
        oh_tile=oh_tile, ow_n=ow, num_experts=e)

    out_flat = pl.pallas_call(
        kernel,
        out_shape=jax.ShapeDtypeStruct((n, oh * ow, co), compute_dtype),
        grid=(n, n_t),
        in_specs=[
            pl.BlockSpec((1, e, 1, 1), lambda i, t: (i, 0, 0, 0)),      # per-sample gate
            pl.BlockSpec((e, kkci, co), lambda i, t: (0, 0, 0)),        # experts (resident)
            pl.BlockSpec((1, hp, wp, ci), lambda i, t: (i, 0, 0, 0)),   # sample (resident over t)
        ],
        out_specs=pl.BlockSpec((1, oh_tile * ow, co), lambda i, t: (i, t, 0)),
        scratch_shapes=[pltpu.VMEM((kkci, co), compute_dtype)],
        compiler_params=pltpu.CompilerParams(
            # TODO(synk): on v7x verify the batch axis actually shards across both TensorCores
            # (else switch that axis to CORE_PARALLEL / an explicit core split).
            dimension_semantics=("parallel", "arbitrary"),
            vmem_limit_bytes=_vmem_limit_bytes()),
    )(gate, w_exp, xp)

    out = out_flat.reshape(n, oh, ow, co).transpose(0, 3, 1, 2)          # back to NCHW
    return out.astype(x.dtype)


def cond_conv2d_ref(x, expert_weight, fc_w, fc_b, *, num_experts, out_channels,
                    kernel_size, stride=1, padding=0, dilation=1, groups=1):
    # Pure-JAX reference mirroring the PyTorch forward (highest precision).
    n, ci, h, w = x.shape
    e, co, k = num_experts, out_channels, kernel_size
    prec = jax.lax.Precision.HIGHEST
    avg = x.mean(axis=(2, 3))                                            # (N, Ci)
    gate = jax.nn.sigmoid(jnp.dot(avg, fc_w.T, precision=prec) + fc_b)   # (N, E)
    mixed = jnp.dot(gate, expert_weight.reshape(e, -1),
                    precision=prec).reshape(n, co, ci, k, k)
    outs = []
    for i in range(n):
        o = jax.lax.conv_general_dilated(
            x[i:i + 1], mixed[i],
            window_strides=(stride, stride),
            padding=[(padding, padding), (padding, padding)],
            rhs_dilation=(dilation, dilation),
            dimension_numbers=("NCHW", "OIHW", "NCHW"),
            precision=prec)
        outs.append(o)
    return jnp.concatenate(outs, axis=0)


if __name__ == "__main__":
    key = jax.random.PRNGKey(0)
    k1, k2, k3, k4 = jax.random.split(key, 4)

    # Small shapes consistent with the module.
    N, Ci, H, W = 2, 4, 16, 16
    E, Co, K = 4, 8, 3
    stride, padding, dilation, groups = 1, 1, 1, 1

    x = jax.random.normal(k1, (N, Ci, H, W), jnp.float32)
    # nn.Parameter(num_experts*out_channels, in_channels//groups, k, k)
    expert_w = 0.1 * jax.random.normal(k2, (E * Co, Ci, K, K), jnp.float32)
    # nn.Linear(in_channels, num_experts): weight (E, Ci), bias (E,)
    fc_w = 0.1 * jax.random.normal(k3, (E, Ci), jnp.float32)
    fc_b = 0.1 * jax.random.normal(k4, (E,), jnp.float32)

    kwargs = dict(num_experts=E, out_channels=Co, kernel_size=K,
                  stride=stride, padding=padding, dilation=dilation, groups=groups)

    ref = cond_conv2d_ref(x, expert_w, fc_w, fc_b, **kwargs)

    # f32 compute path: tight tolerance.
    out_f32 = jax.block_until_ready(
        cond_conv2d(x, expert_w, fc_w, fc_b, compute_dtype=jnp.float32, **kwargs))
    assert out_f32.shape == (N, Co, H, W), out_f32.shape
    err_f32 = float(jnp.max(jnp.abs(out_f32 - ref)))
    assert err_f32 < 1e-3, f"f32 mismatch vs reference: max_err={err_f32}"

    # bf16 MXU-operand path (default): looser, dtype-appropriate tolerance.
    out_bf16 = jax.block_until_ready(
        cond_conv2d(x, expert_w, fc_w, fc_b, compute_dtype=jnp.bfloat16, **kwargs))
    assert out_bf16.shape == (N, Co, H, W), out_bf16.shape
    err_bf16 = float(jnp.max(jnp.abs(out_bf16 - ref)))
    assert err_bf16 < 5e-2, f"bf16 mismatch vs reference: max_err={err_bf16}"

    print("KERNEL_OK")
</pallas_src>

<mosaic_0001>
module attributes {stable_mosaic.version = 11 : i64} {
  func.func @_cond_conv_kernel(%arg0: i32, %arg1: i32, %arg2: memref<1x4x1x1xf32, #tpu.memory_space<vmem>>, %arg3: memref<4x36x8xf32, #tpu.memory_space<vmem>>, %arg4: memref<1x18x18x4xf32, #tpu.memory_space<vmem>>, %arg5: memref<1x256x8xf32, #tpu.memory_space<vmem>>, %arg6: memref<36x8xf32, #tpu.memory_space<vmem>>) attributes {dimension_semantics = [#tpu.dimension_semantics<parallel>, #tpu.dimension_semantics<arbitrary>], iteration_bounds = array<i64: 2, 1>, scalar_prefetch = 0 : i64, scratch_operands = 1 : i64, tpu.core_type = #tpu.core_type<tc>, window_params = [{transform_indices = @transform_0, window_bounds = array<i64: 1, 4, 1, 1>}, {pipeline_mode = #tpu.pipeline_mode<synchronous>, transform_indices = @transform_1, window_bounds = array<i64: 4, 36, 8>}, {transform_indices = @transform_2, window_bounds = array<i64: 1, 18, 18, 4>}, {transform_indices = @transform_3, window_bounds = array<i64: 1, 256, 8>}]} {
    %c0_i32 = arith.constant 0 : i32
    %0 = arith.cmpi eq, %arg1, %c0_i32 : i32
    %1 = arith.extui %0 : i1 to i32
    %c0_i32_0 = arith.constant 0 : i32
    %2 = arith.cmpi ne, %1, %c0_i32_0 : i32
    scf.if %2 {
      %c0_46 = arith.constant 0 : index
      %c0_47 = arith.constant 0 : index
      %c0_48 = arith.constant 0 : index
      %c0_49 = arith.constant 0 : index
      %56 = vector.load %arg2[%c0_46, %c0_47, %c0_48, %c0_49] : memref<1x4x1x1xf32, #tpu.memory_space<vmem>>, vector<1x1x1x1xf32>
      %57 = vector.shape_cast %56 : vector<1x1x1x1xf32> to vector<1x1xf32>
      %c0_50 = arith.constant 0 : index
      %c0_51 = arith.constant 0 : index
      %c0_52 = arith.constant 0 : index
      %58 = vector.load %arg3[%c0_50, %c0_51, %c0_52] : memref<4x36x8xf32, #tpu.memory_space<vmem>>, vector<1x36x8xf32>
      %59 = vector.shape_cast %58 : vector<1x36x8xf32> to vector<36x8xf32>
      %60 = vector.broadcast %57 : vector<1x1xf32> to vector<36x8xf32>
      %61 = arith.mulf %60, %59 : vector<36x8xf32>
      %c0_53 = arith.constant 0 : index
      %c1_54 = arith.constant 1 : index
      %c0_55 = arith.constant 0 : index
      %c0_56 = arith.constant 0 : index
      %62 = vector.load %arg2[%c0_53, %c1_54, %c0_55, %c0_56] : memref<1x4x1x1xf32, #tpu.memory_space<vmem>>, vector<1x1x1x1xf32>
      %63 = vector.shape_cast %62 : vector<1x1x1x1xf32> to vector<1x1xf32>
      %c1_57 = arith.constant 1 : index
      %c0_58 = arith.constant 0 : index
      %c0_59 = arith.constant 0 : index
      %64 = vector.load %arg3[%c1_57, %c0_58, %c0_59] : memref<4x36x8xf32, #tpu.memory_space<vmem>>, vector<1x36x8xf32>
      %65 = vector.shape_cast %64 : vector<1x36x8xf32> to vector<36x8xf32>
      %66 = vector.broadcast %63 : vector<1x1xf32> to vector<36x8xf32>
      %67 = arith.mulf %66, %65 : vector<36x8xf32>
      %68 = arith.addf %61, %67 : vector<36x8xf32>
      %c0_60 = arith.constant 0 : index
      %c2_61 = arith.constant 2 : index
      %c0_62 = arith.constant 0 : index
      %c0_63 = arith.constant 0 : index
      %69 = vector.load %arg2[%c0_60, %c2_61, %c0_62, %c0_63] : memref<1x4x1x1xf32, #tpu.memory_space<vmem>>, vector<1x1x1x1xf32>
      %70 = vector.shape_cast %69 : vector<1x1x1x1xf32> to vector<1x1xf32>
      %c2_64 = arith.constant 2 : index
      %c0_65 = arith.constant 0 : index
      %c0_66 = arith.constant 0 : index
      %71 = vector.load %arg3[%c2_64, %c0_65, %c0_66] : memref<4x36x8xf32, #tpu.memory_space<vmem>>, vector<1x36x8xf32>
      %72 = vector.shape_cast %71 : vector<1x36x8xf32> to vector<36x8xf32>
      %73 = vector.broadcast %70 : vector<1x1xf32> to vector<36x8xf32>
      %74 = arith.mulf %73, %72 : vector<36x8xf32>
      %75 = arith.addf %68, %74 : vector<36x8xf32>
      %c0_67 = arith.constant 0 : index
      %c3 = arith.constant 3 : index
      %c0_68 = arith.constant 0 : index
      %c0_69 = arith.constant 0 : index
      %76 = vector.load %arg2[%c0_67, %c3, %c0_68, %c0_69] : memref<1x4x1x1xf32, #tpu.memory_space<vmem>>, vector<1x1x1x1xf32>
      %77 = vector.shape_cast %76 : vector<1x1x1x1xf32> to vector<1x1xf32>
      %c3_70 = arith.constant 3 : index
      %c0_71 = arith.constant 0 : index
      %c0_72 = arith.constant 0 : index
      %78 = vector.load %arg3[%c3_70, %c0_71, %c0_72] : memref<4x36x8xf32, #tpu.memory_space<vmem>>, vector<1x36x8xf32>
      %79 = vector.shape_cast %78 : vector<1x36x8xf32> to vector<36x8xf32>
      %80 = vector.broadcast %77 : vector<1x1xf32> to vector<36x8xf32>
      %81 = arith.mulf %80, %79 : vector<36x8xf32>
      %82 = arith.addf %75, %81 : vector<36x8xf32>
      %c0_73 = arith.constant 0 : index
      %c0_74 = arith.constant 0 : index
      %83 = vector.load %arg6[%c0_73, %c0_74] : memref<36x8xf32, #tpu.memory_space<vmem>>, vector<36x8xf32>
      tpu.vector_store %arg6[%c0_73, %c0_74], %82 {strides = array<i32>} : memref<36x8xf32, #tpu.memory_space<vmem>>, vector<36x8xf32>,
    } else {
    }
    %c16_i32 = arith.constant 16 : i32
    %3 = arith.muli %arg1, %c16_i32 : i32
    %c1_i32 = arith.constant 1 : i32
    %4 = arith.muli %3, %c1_i32 : i32
    %c0_i32_1 = arith.constant 0 : i32
    %5 = arith.addi %4, %c0_i32_1 : i32
    %c0 = arith.constant 0 : index
    %6 = arith.index_cast %5 : i32 to index
    %c0_2 = arith.constant 0 : index
    %c0_3 = arith.constant 0 : index
    %7 = vector.load %arg4[%c0, %6, %c0_2, %c0_3] : memref<1x18x18x4xf32, #tpu.memory_space<vmem>>, vector<1x16x16x4xf32>
    %8 = vector.shape_cast %7 : vector<1x16x16x4xf32> to vector<16x16x4xf32>
    %c1_i32_4 = arith.constant 1 : i32
    %9 = arith.muli %3, %c1_i32_4 : i32
    %c0_i32_5 = arith.constant 0 : i32
    %10 = arith.addi %9, %c0_i32_5 : i32
    %c0_6 = arith.constant 0 : index
    %11 = arith.index_cast %10 : i32 to index
    %c1 = arith.constant 1 : index
    %c0_7 = arith.constant 0 : index
    %12 = vector.load %arg4[%c0_6, %11, %c1, %c0_7] : memref<1x18x18x4xf32, #tpu.memory_space<vmem>>, vector<1x16x16x4xf32>
    %13 = vector.shape_cast %12 : vector<1x16x16x4xf32> to vector<16x16x4xf32>
    %c1_i32_8 = arith.constant 1 : i32
    %14 = arith.muli %3, %c1_i32_8 : i32
    %c0_i32_9 = arith.constant 0 : i32
    %15 = arith.addi %14, %c0_i32_9 : i32
    %c0_10 = arith.constant 0 : index
    %16 = arith.index_cast %15 : i32 to index
    %c2 = arith.constant 2 : index
    %c0_11 = arith.constant 0 : index
    %17 = vector.load %arg4[%c0_10, %16, %c2, %c0_11] : memref<1x18x18x4xf32, #tpu.memory_space<vmem>>, vector<1x16x16x4xf32>
    %18 = vector.shape_cast %17 : vector<1x16x16x4xf32> to vector<16x16x4xf32>
    %c1_i32_12 = arith.constant 1 : i32
    %19 = arith.muli %3, %c1_i32_12 : i32
    %c1_i32_13 = arith.constant 1 : i32
    %20 = arith.addi %19, %c1_i32_13 : i32
    %c0_14 = arith.constant 0 : index
    %21 = arith.index_cast %20 : i32 to index
    %c0_15 = arith.constant 0 : index
    %c0_16 = arith.constant 0 : index
    %22 = vector.load %arg4[%c0_14, %21, %c0_15, %c0_16] : memref<1x18x18x4xf32, #tpu.memory_space<vmem>>, vector<1x16x16x4xf32>
    %23 = vector.shape_cast %22 : vector<1x16x16x4xf32> to vector<16x16x4xf32>
    %c1_i32_17 = arith.constant 1 : i32
    %24 = arith.muli %3, %c1_i32_17 : i32
    %c1_i32_18 = arith.constant 1 : i32
    %25 = arith.addi %24, %c1_i32_18 : i32
    %c0_19 = arith.constant 0 : index
    %26 = arith.index_cast %25 : i32 to index
    %c1_20 = arith.constant 1 : index
    %c0_21 = arith.constant 0 : index
    %27 = vector.load %arg4[%c0_19, %26, %c1_20, %c0_21] : memref<1x18x18x4xf32, #tpu.memory_space<vmem>>, vector<1x16x16x4xf32>
    %28 = vector.shape_cast %27 : vector<1x16x16x4xf32> to vector<16x16x4xf32>
    %c1_i32_22 = arith.constant 1 : i32
    %29 = arith.muli %3, %c1_i32_22 : i32
    %c1_i32_23 = arith.constant 1 : i32
    %30 = arith.addi %29, %c1_i32_23 : i32
    %c0_24 = arith.constant 0 : index
    %31 = arith.index_cast %30 : i32 to index
    %c2_25 = arith.constant 2 : index
    %c0_26 = arith.constant 0 : index
    %32 = vector.load %arg4[%c0_24, %31, %c2_25, %c0_26] : memref<1x18x18x4xf32, #tpu.memory_space<vmem>>, vector<1x16x16x4xf32>
    %33 = vector.shape_cast %32 : vector<1x16x16x4xf32> to vector<16x16x4xf32>
    %c1_i32_27 = arith.constant 1 : i32
    %34 = arith.muli %3, %c1_i32_27 : i32
    %c2_i32 = arith.constant 2 : i32
    %35 = arith.addi %34, %c2_i32 : i32
    %c0_28 = arith.constant 0 : index
    %36 = arith.index_cast %35 : i32 to index
    %c0_29 = arith.constant 0 : index
    %c0_30 = arith.constant 0 : index
    %37 = vector.load %arg4[%c0_28, %36, %c0_29, %c0_30] : memref<1x18x18x4xf32, #tpu.memory_space<vmem>>, vector<1x16x16x4xf32>
    %38 = vector.shape_cast %37 : vector<1x16x16x4xf32> to vector<16x16x4xf32>
    %c1_i32_31 = arith.constant 1 : i32
    %39 = arith.muli %3, %c1_i32_31 : i32
    %c2_i32_32 = arith.constant 2 : i32
    %40 = arith.addi %39, %c2_i32_32 : i32
    %c0_33 = arith.constant 0 : index
    %41 = arith.index_cast %40 : i32 to index
    %c1_34 = arith.constant 1 : index
    %c0_35 = arith.constant 0 : index
    %42 = vector.load %arg4[%c0_33, %41, %c1_34, %c0_35] : memref<1x18x18x4xf32, #tpu.memory_space<vmem>>, vector<1x16x16x4xf32>
    %43 = vector.shape_cast %42 : vector<1x16x16x4xf32> to vector<16x16x4xf32>
    %c1_i32_36 = arith.constant 1 : i32
    %44 = arith.muli %3, %c1_i32_36 : i32
    %c2_i32_37 = arith.constant 2 : i32
    %45 = arith.addi %44, %c2_i32_37 : i32
    %c0_38 = arith.constant 0 : index
    %46 = arith.index_cast %45 : i32 to index
    %c2_39 = arith.constant 2 : index
    %c0_40 = arith.constant 0 : index
    %47 = vector.load %arg4[%c0_38, %46, %c2_39, %c0_40] : memref<1x18x18x4xf32, #tpu.memory_space<vmem>>, vector<1x16x16x4xf32>
    %48 = vector.shape_cast %47 : vector<1x16x16x4xf32> to vector<16x16x4xf32>
    %49 = tpu.concatenate %8, %13, %18, %23, %28, %33, %38, %43, %48 in 2 : vector<16x16x4xf32>, vector<16x16x4xf32>, vector<16x16x4xf32>, vector<16x16x4xf32>, vector<16x16x4xf32>, vector<16x16x4xf32>, vector<16x16x4xf32>, vector<16x16x4xf32>, vector<16x16x4xf32> -> vector<16x16x36xf32>
    %50 = vector.shape_cast %49 : vector<16x16x36xf32> to vector<256x36xf32>
    %c0_41 = arith.constant 0 : index
    %c0_42 = arith.constant 0 : index
    %51 = vector.load %arg6[%c0_41, %c0_42] : memref<36x8xf32, #tpu.memory_space<vmem>>, vector<36x8xf32>
    %cst = arith.constant dense<0.000000e+00> : vector<256x8xf32>
    %52 = tpu.matmul %50, %51, %cst {dimension_numbers = #tpu.dot_dimension_numbers<[1], [0], [0], [1], [0, 0, 1, 1], [], []>} : vector<256x36xf32>, vector<36x8xf32>, vector<256x8xf32> -> vector<256x8xf32>
    %c0_43 = arith.constant 0 : index
    %c0_44 = arith.constant 0 : index
    %c0_45 = arith.constant 0 : index
    %53 = vector.load %arg5[%c0_43, %c0_44, %c0_45] : memref<1x256x8xf32, #tpu.memory_space<vmem>>, vector<1x256x8xf32>
    %54 = vector.shape_cast %53 : vector<1x256x8xf32> to vector<256x8xf32>
    %55 = vector.shape_cast %52 : vector<256x8xf32> to vector<1x256x8xf32>
    tpu.vector_store %arg5[%c0_43, %c0_44, %c0_45], %55 {strides = array<i32>} : memref<1x256x8xf32, #tpu.memory_space<vmem>>, vector<1x256x8xf32>,
    return
  }
  func.func @transform_0(%arg0: i32, %arg1: i32) -> (i32, i32, i32, i32) {
    %c0_i32 = arith.constant 0 : i32
    %c0_i32_0 = arith.constant 0 : i32
    %c0_i32_1 = arith.constant 0 : i32
    %c0_i32_2 = arith.constant 0 : i32
    return %arg0, %c0_i32, %c0_i32_0, %c0_i32_1 : i32, i32, i32, i32
  }
  func.func @transform_1(%arg0: i32, %arg1: i32) -> (i32, i32, i32) {
    %c0_i32 = arith.constant 0 : i32
    %c0_i32_0 = arith.constant 0 : i32
    %c0_i32_1 = arith.constant 0 : i32
    %c0_i32_2 = arith.constant 0 : i32
    return %c0_i32, %c0_i32_0, %c0_i32_1 : i32, i32, i32
  }
  func.func @transform_2(%arg0: i32, %arg1: i32) -> (i32, i32, i32, i32) {
    %c0_i32 = arith.constant 0 : i32
    %c0_i32_0 = arith.constant 0 : i32
    %c0_i32_1 = arith.constant 0 : i32
    %c0_i32_2 = arith.constant 0 : i32
    return %arg0, %c0_i32, %c0_i32_0, %c0_i32_1 : i32, i32, i32, i32
  }
  func.func @transform_3(%arg0: i32, %arg1: i32) -> (i32, i32, i32) {
    %c0_i32 = arith.constant 0 : i32
    %c0_i32_0 = arith.constant 0 : i32
    return %arg0, %arg1, %c0_i32 : i32, i32, i32
  }
}

</mosaic_0001>

<llo_original>
// kernel: tpu_custom_call.1
$region0: #{tpu_custom_call.1}
  #allocation0 [shape = 'u32[]', space=smem, size = 0x4, offset = 0x4, fixed_abs, tag = 'smem constant byte address 0x4 - core index']
  #allocation1 [shape = 'u32[144,128]{1,0:T(1,128)}', space=vmem, size = 0x12000, scoped, tag = 'internal scratch']
  #allocation2 [shape = 'f32[36,8]{1,0:T(8,128)}', space=vmem, size = 0x5000, scoped, tag = 'scratch operand']
  %s0 = inlined_call_operand.hbm [shape: f32[2,4,1,1], index: 0, kind: input, shape index: {}]
  %s1 = inlined_call_operand.hbm [shape: f32[4,36,8], index: 1, kind: input, shape index: {}]
  %s2 = inlined_call_operand.hbm [shape: f32[2,18,18,4], index: 2, kind: input, shape index: {}]
  %s3 = inlined_call_operand.hbm [shape: f32[2,256,8], index: 3, kind: output, shape index: {}]
  %s4 = sld [smem:[#allocation0]]
  $region61: #{tpu_custom_call.1} parent=0
    _
  %s6 = ssub.s32 1, %s4
  %s7 = scalar_select 0, %s6, %s4
  $region1: #{tpu_custom_call.1} parent=0
    #allocation3 [shape = 'u8[4096]{0}', space=vmem, size = 0x1000, scoped, tag = 'input window, operand 0']
    #allocation4 [shape = 's32[2]{0}', space=sflag, size = 0x8, scoped, tag = 'scoped memory for tpu_custom_call.1']
    #allocation5 [shape = 's32[2]{0}', space=sflag, size = 0x8, scoped, tag = 'scoped memory for tpu_custom_call.1']
    #allocation6 [shape = 'u8[81920]{0}', space=vmem, size = 0x14000, scoped, tag = 'input window, operand 1, single buffered']
    #allocation7 [shape = 's32[1]{0}', space=sflag, size = 0x4, scoped, tag = 'scoped memory for tpu_custom_call.1']
    #allocation8 [shape = 'u8[442368]{0}', space=vmem, size = 0x6c000, scoped, tag = 'input window, operand 2']
    #allocation9 [shape = 'u8[262144]{0}', space=vmem, size = 0x40000, scoped, tag = 'output window, operand 0']
    %8 = vsyncpa [#allocation4], 0
    %s9 = scalar_lea.sflag [#allocation4], 1
    %10 = vsyncpa %s9, 0
    %11 = vsyncpa [#allocation7], 0
    %12 = vsyncpa [#allocation5], 0
    %s13 = scalar_lea.sflag [#allocation5], 1
    %14 = vsyncpa %s13, 0
    loop: start=0, step=1, limit=4
    $region2: #{tpu_custom_call.1} parent=1 // loop_pre_header
      _
    $region3: #{tpu_custom_call.1} parent=1 // loop_header
      %s16 = sphi 0, %s20
      %p17 = scmp.ge.s32.totalorder %s16, 4
      %s23 = sphi 0, %s35
      %s24 = sphi 0, %s31
      %s25 = sphi 0, %s23
      %s26 = sphi 0, %s24
      %s27 = sphi 0, %s25
      %s28 = sphi 0, %s26
      %s38 = sphi 0, %s40
      %s41 = sphi 0, %s38
      %s42 = sphi 0, %s41
      %s58 = sphi 0, %s42
      %s62 = sphi 0, %s62
      %s64 = sphi 0, %s62
      %s65 = sphi 0, %s64
      %s79 = sphi 0, %s65
      %s85 = sphi 0, %s87
      %s88 = sphi 0, %s85
      %s89 = sphi 0, %s88
      %s105 = sphi 0, %s89
      %s113 = sphi 0, %s115
      %s116 = sphi 0, %s113
      %s117 = sphi 0, %s116
      %s133 = sphi 0, %s117
    $region4: #{tpu_custom_call.1} parent=1 // loop_header_branch
      %19 = sbr.rel (%p17) target = $region8
    $region5: #{tpu_custom_call.1} parent=1 // loop_body
      %s21 = ssub.s32 %s16, 1
      %s22 = ssub.s32 %s16, 2
      %s29 = sadd.s32 1, %s24
      %p30 = scmp.ge.s32.totalorder %s29, 1
      %s31 = scalar_select %p30, 0, %s29
      %s32 = sadd.s32 1, %s23
      %s33 = scalar_select %p30, %s32, %s23
      %p34 = scmp.ge.s32.totalorder %s33, 2
      %s35 = scalar_select %p34, 0, %s33
      %s36 = ssub.s32 %s23, %s35
      %p37 = scmp.eq.s32.totalorder %s36, 0
      %s39 = sadd.s32 %s38, 1
      %s40 = scalar_select %p37, %s38, %s39
      %p43 = pneg %p37
      %p44 = scmp.eq.s32.totalorder %s16, 1
      %p45 = por %p43, %p44
      %p46 = scmp.ne.s32.totalorder %s38, %s41
      %p47 = scmp.eq.s32.totalorder %s16, 0
      %p48 = por %p46, %p47
      %p49 = scmp.ne.s32.totalorder %s38, %s41
      %p50 = scmp.eq.s32.totalorder %s21, 1
      %p51 = por %p49, %p50
      %p52 = scmp.ne.s32.totalorder %s41, %s42
      %p53 = scmp.eq.s32.totalorder %s21, 0
      %p54 = por %p52, %p53
      %p55 = scmp.ne.s32.totalorder %s41, %s42
      %p56 = scmp.eq.s32.totalorder %s22, 1
      %p57 = por %p55, %p56
      %p59 = scmp.ne.s32.totalorder %s42, %s58
      %p60 = scmp.eq.s32.totalorder %s22, 0
      %p61 = por %p59, %p60
      %s63 = sadd.s32 %s62, 1
      %p66 = scmp.eq.s32.totalorder %s16, 1
      %p67 = scmp.ne.s32.totalorder %s62, %s64
      %p68 = scmp.eq.s32.totalorder %s16, 0
      %p69 = por %p67, %p68
      %p70 = scmp.ne.s32.totalorder %s62, %s64
      %p71 = scmp.eq.s32.totalorder %s21, 1
      %p72 = por %p70, %p71
      %p73 = scmp.ne.s32.totalorder %s64, %s65
      %p74 = scmp.eq.s32.totalorder %s21, 0
      %p75 = por %p73, %p74
      %p76 = scmp.ne.s32.totalorder %s64, %s65
      %p77 = scmp.eq.s32.totalorder %s22, 1
      %p78 = por %p76, %p77
      %p80 = scmp.ne.s32.totalorder %s65, %s79
      %p81 = scmp.eq.s32.totalorder %s22, 0
      %p82 = por %p80, %p81
      %s83 = ssub.s32 %s23, %s35
      %p84 = scmp.eq.s32.totalorder %s83, 0
      %s86 = sadd.s32 %s85, 1
      %s87 = scalar_select %p84, %s85, %s86
      %p90 = pneg %p84
      %p91 = scmp.eq.s32.totalorder %s16, 1
      %p92 = por %p90, %p91
      %p93 = scmp.ne.s32.totalorder %s85, %s88
      %p94 = scmp.eq.s32.totalorder %s16, 0
      %p95 = por %p93, %p94
      %p96 = scmp.ne.s32.totalorder %s85, %s88
      %p97 = scmp.eq.s32.totalorder %s21, 1
      %p98 = por %p96, %p97
      %p99 = scmp.ne.s32.totalorder %s88, %s89
      %p100 = scmp.eq.s32.totalorder %s21, 0
      %p101 = por %p99, %p100
      %p102 = scmp.ne.s32.totalorder %s88, %s89
      %p103 = scmp.eq.s32.totalorder %s22, 1
      %p104 = por %p102, %p103
      %p106 = scmp.ne.s32.totalorder %s89, %s105
      %p107 = scmp.eq.s32.totalorder %s22, 0
      %p108 = por %p106, %p107
      %s109 = ssub.s32 %s23, %s35
      %s110 = ssub.s32 %s24, %s31
      %s111 = sor.u32 %s109, %s110
      %p112 = scmp.eq.s32.totalorder %s111, 0
      %s114 = sadd.s32 %s113, 1
      %s115 = scalar_select %p112, %s113, %s114
      %p118 = pneg %p112
      %p119 = scmp.eq.s32.totalorder %s16, 1
      %p120 = por %p118, %p119
      %p121 = scmp.ne.s32.totalorder %s113, %s116
      %p122 = scmp.eq.s32.totalorder %s16, 0
      %p123 = por %p121, %p122
      %p124 = scmp.ne.s32.totalorder %s113, %s116
      %p125 = scmp.eq.s32.totalorder %s21, 1
      %p126 = por %p124, %p125
      %p127 = scmp.ne.s32.totalorder %s116, %s117
      %p128 = scmp.eq.s32.totalorder %s21, 0
      %p129 = por %p127, %p128
      %p130 = scmp.ne.s32.totalorder %s116, %s117
      %p131 = scmp.eq.s32.totalorder %s22, 1
      %p132 = por %p130, %p131
      %p134 = scmp.ne.s32.totalorder %s117, %s133
      %p135 = scmp.eq.s32.totalorder %s22, 0
      %p136 = por %p134, %p135
      %p137 = scmp.le.s32.totalorder 1, %s16
      %p138 = scmp.lt.s32.totalorder %s16, 3
      %p139 = pnand %p137, %p138
      %p140 = pneg %p139
      // Predicated region
      $region9: #{tpu_custom_call.1} parent=5 // pred_check
        _
      $region10: #{tpu_custom_call.1} parent=5 // pred_check_branch
        %142 = sbr.rel (%p139) target = $region12
      $region11: #{tpu_custom_call.1} parent=5 // pred_region
        %s143 = ssub.s32 %s16, 1
        // Predicated region
        $region13: #{tpu_custom_call.1} parent=11 // pred_check
          %p144 = pneg %p75
        $region14: #{tpu_custom_call.1} parent=11 // pred_check_branch
          %146 = sbr.rel (%p144) target = $region16
        $region15: #{tpu_custom_call.1} parent=11 // pred_region
          %s148 = ssub.s32 2560, 2560
          %149 = vsyncadd [#allocation7], %s148
          %s150 = sshll.u32 [#allocation6], 4
          %s151 = int_to_ptr.vmem [resolvable:$true] %s150
          %156 = dma.hbm_to_vmem [thread:$0]  %s1, 2560, %s151, [#allocation7], 128, 128, 8
        $region16: #{tpu_custom_call.1} parent=11 // pred_fallthru
          _
      $region12: #{tpu_custom_call.1} parent=5 // pred_fallthru
        _
      %p157 = scmp.lt.s32.totalorder %s16, 2
      // Predicated region
      $region17: #{tpu_custom_call.1} parent=5 // pred_check
        %p158 = pneg %p157
      $region18: #{tpu_custom_call.1} parent=5 // pred_check_branch
        %160 = sbr.rel (%p158) target = $region20
      $region19: #{tpu_custom_call.1} parent=5 // pred_region
        // Predicated region
        $region21: #{tpu_custom_call.1} parent=19 // pred_check
          %p161 = pneg %p48
        $region22: #{tpu_custom_call.1} parent=19 // pred_check_branch
          %163 = sbr.rel (%p161) target = $region24
        $region23: #{tpu_custom_call.1} parent=19 // pred_region
          %s164 = sand.u32 %s16, 1
          %s165 = scalar_lea.sflag [#allocation4], %s164
          %s166 = sand.u32 %s38, 1
          %s167 = smul.addr %s166, 4
          %s168 = scalar_lea.vmem [#allocation3], %s167
          %s170 = ssub.s32 64, 64
          %171 = vsyncadd %s165, %s170
          %s172 = smul.addr %s23, 4
          %s173 = smul.addr %s172, 16
          %s174 = scalar_lea.hbm %s0, %s173
          %s175 = sshll.u32 %s168, 4
          %s176 = int_to_ptr.vmem [resolvable:$true] %s175
          %181 = dma.hbm_to_vmem [thread:$0]  %s174, 64, %s176, %s165, 16, 16, 1
        $region24: #{tpu_custom_call.1} parent=19 // pred_fallthru
          _
        // Predicated region
        $region25: #{tpu_custom_call.1} parent=19 // pred_check
          %p182 = pneg %p95
        $region26: #{tpu_custom_call.1} parent=19 // pred_check_branch
          %184 = sbr.rel (%p182) target = $region28
        $region27: #{tpu_custom_call.1} parent=19 // pred_region
          %s185 = sand.u32 %s16, 1
          %s186 = scalar_lea.sflag [#allocation4], %s185
          %s187 = sand.u32 %s85, 1
          %s188 = smul.addr %s187, 432
          %s189 = scalar_lea.vmem [#allocation8], %s188
          %s191 = ssub.s32 6912, 6912
          %192 = vsyncadd %s186, %s191
          %s193 = smul.addr %s23, 54
          %s194 = smul.addr %s193, 128
          %s195 = scalar_lea.hbm %s2, %s194
          %s196 = sshll.u32 %s189, 4
          %s197 = int_to_ptr.vmem [resolvable:$true] %s196
          %202 = dma.hbm_to_vmem [thread:$0]  %s195, 6912, %s197, %s186, 128, 128, 8
        $region28: #{tpu_custom_call.1} parent=19 // pred_fallthru
          _
      $region20: #{tpu_custom_call.1} parent=5 // pred_fallthru
        _
      %p203 = scmp.le.s32.totalorder 1, %s16
      %p204 = scmp.lt.s32.totalorder %s16, 3
      %p205 = pnand %p203, %p204
      %p206 = pneg %p205
      // Predicated region
      $region29: #{tpu_custom_call.1} parent=5 // pred_check
        _
      $region30: #{tpu_custom_call.1} parent=5 // pred_check_branch
        %208 = sbr.rel (%p205) target = $region32
      $region31: #{tpu_custom_call.1} parent=5 // pred_region
        %s209 = ssub.s32 %s16, 1
        %s210 = sand.u32 %s21, 1
        %s211 = scalar_lea.sflag [#allocation4], %s210
        %s212 = sand.u32 %s41, 1
        %s213 = smul.addr %s212, 4
        %s214 = scalar_lea.vmem [#allocation3], %s213
        // Predicated region
        $region33: #{tpu_custom_call.1} parent=31 // pred_check
          %p215 = pneg %p54
        $region34: #{tpu_custom_call.1} parent=31 // pred_check_branch
          %217 = sbr.rel (%p215) target = $region36
        $region35: #{tpu_custom_call.1} parent=31 // pred_region
          %218 = dma.done %s211, 64
        $region36: #{tpu_custom_call.1} parent=31 // pred_fallthru
          _
        // Predicated region
        $region37: #{tpu_custom_call.1} parent=31 // pred_check
          %p219 = pneg %p75
        $region38: #{tpu_custom_call.1} parent=31 // pred_check_branch
          %221 = sbr.rel (%p219) target = $region40
        $region39: #{tpu_custom_call.1} parent=31 // pred_region
          %222 = dma.done [#allocation7], 2560
        $region40: #{tpu_custom_call.1} parent=31 // pred_fallthru
          _
        %s223 = sand.u32 %s21, 1
        %s224 = scalar_lea.sflag [#allocation4], %s223
        %s225 = sand.u32 %s88, 1
        %s226 = smul.addr %s225, 432
        %s227 = scalar_lea.vmem [#allocation8], %s226
        // Predicated region
        $region41: #{tpu_custom_call.1} parent=31 // pred_check
          %p228 = pneg %p101
        $region42: #{tpu_custom_call.1} parent=31 // pred_check_branch
          %230 = sbr.rel (%p228) target = $region44
        $region43: #{tpu_custom_call.1} parent=31 // pred_region
          %231 = dma.done %s224, 6912
        $region44: #{tpu_custom_call.1} parent=31 // pred_fallthru
          _
        %s232 = sand.u32 %s21, 1
        %s233 = scalar_lea.sflag [#allocation4], %s232
        %s234 = sand.u32 %s41, 1
        %s235 = smul.addr %s234, 4
        %s236 = scalar_lea.vmem [#allocation3], %s235
        %p237 = pneg %p54
        %p238 = pneg %p51
        %p239 = pneg %p75
        %p240 = pneg %p72
        %s241 = sand.u32 %s21, 1
        %s242 = scalar_lea.sflag [#allocation4], %s241
        %s243 = sand.u32 %s88, 1
        %s244 = smul.addr %s243, 432
        %s245 = scalar_lea.vmem [#allocation8], %s244
        %p246 = pneg %p101
        %p247 = pneg %p98
        %p248 = pneg %p129
        %p249 = pneg %p126
        %s250 = sand.u32 %s116, 1
        %s251 = scalar_lea.sflag [#allocation5], %s250
        %s252 = sand.u32 %s116, 1
        %s253 = smul.addr %s252, 256
        %s254 = scalar_lea.vmem [#allocation9], %s253
        %s255 = smul.u32 32, %s26
        %p256 = scmp.eq.s32.totalorder %s26, 0
        // Predicated region
        $region45: #{tpu_custom_call.1} parent=31 // pred_check
          %p257 = pneg %p256
        $region46: #{tpu_custom_call.1} parent=31 // pred_check_branch
          %259 = sbr.rel (%p257) target = $region48
        $region47: #{tpu_custom_call.1} parent=31 // pred_region
          %v260 = vld [vmem:[%s214] sm:$0x1]
          %v261 = vld [vmem:[#allocation6] sm:$0xff]
          %v262 = vld [vmem:[#allocation6 + $0x8] sm:$0xff]
          %v263 = vld [vmem:[#allocation6 + $0x10] sm:$0xff]
          %v264 = vld [vmem:[#allocation6 + $0x18] sm:$0xff]
          %v265 = vld [vmem:[#allocation6 + $0x20] sm:$0xf]
          %v267 = vlaneseq
          %v268 = vshrl.u32 %v267, 7
          %v269 = vsub.s32 0, %v268
          %v270 = vrot.slane %v260, %v269
          %271 = vset.pattern.permute.xlu0 0
          %272 = vperm.xlu0 %271, %v270
          %v273 = vpop.permute.xlu0 %272
          %v275 = vmul.f32 %v273, %v261
          %v276 = vmul.f32 %v273, %v262
          %v277 = vmul.f32 %v273, %v263
          %v278 = vmul.f32 %v273, %v264
          %v279 = vmul.f32 %v273, %v265
          %s280 = scalar_lea.vmem %s214, 1 [#allocation3]
          %v281 = vld [vmem:[%s280] sm:$0x1]
          %s282 = scalar_lea.vmem [#allocation6], 40
          %v283 = vld [vmem:[%s282] sm:$0xff]
          %v284 = vld [vmem:[%s282 + $0x8] sm:$0xff]
          %v285 = vld [vmem:[%s282 + $0x10] sm:$0xff]
          %v286 = vld [vmem:[%s282 + $0x18] sm:$0xff]
          %v287 = vld [vmem:[%s282 + $0x20] sm:$0xf]
          %v289 = vlaneseq
          %v290 = vshrl.u32 %v289, 7
          %v291 = vsub.s32 0, %v290
          %v292 = vrot.slane %v281, %v291
          %293 = vset.pattern.permute.xlu0 0
          %294 = vperm.xlu0 %293, %v292
          %v295 = vpop.permute.xlu0 %294
          %v297 = vmul.f32 %v295, %v283
          %v298 = vmul.f32 %v295, %v284
          %v299 = vmul.f32 %v295, %v285
          %v300 = vmul.f32 %v295, %v286
          %v301 = vmul.f32 %v295, %v287
          %v302 = vadd.f32 %v275, %v297
          %v303 = vadd.f32 %v276, %v298
          %v304 = vadd.f32 %v277, %v299
          %v305 = vadd.f32 %v278, %v300
          %v306 = vadd.f32 %v279, %v301
          %s307 = scalar_lea.vmem %s214, 2 [#allocation3]
          %v308 = vld [vmem:[%s307] sm:$0x1]
          %s309 = scalar_lea.vmem [#allocation6], 80
          %v310 = vld [vmem:[%s309] sm:$0xff]
          %v311 = vld [vmem:[%s309 + $0x8] sm:$0xff]
          %v312 = vld [vmem:[%s309 + $0x10] sm:$0xff]
          %v313 = vld [vmem:[%s309 + $0x18] sm:$0xff]
          %v314 = vld [vmem:[%s309 + $0x20] sm:$0xf]
          %v316 = vlaneseq
          %v317 = vshrl.u32 %v316, 7
          %v318 = vsub.s32 0, %v317
          %v319 = vrot.slane %v308, %v318
          %320 = vset.pattern.permute.xlu0 0
          %321 = vperm.xlu0 %320, %v319
          %v322 = vpop.permute.xlu0 %321
          %v324 = vmul.f32 %v322, %v310
          %v325 = vmul.f32 %v322, %v311
          %v326 = vmul.f32 %v322, %v312
          %v327 = vmul.f32 %v322, %v313
          %v328 = vmul.f32 %v322, %v314
          %v329 = vadd.f32 %v302, %v324
          %v330 = vadd.f32 %v303, %v325
          %v331 = vadd.f32 %v304, %v326
          %v332 = vadd.f32 %v305, %v327
          %v333 = vadd.f32 %v306, %v328
          %s334 = scalar_lea.vmem %s214, 3 [#allocation3]
          %v335 = vld [vmem:[%s334] sm:$0x1]
          %s336 = scalar_lea.vmem [#allocation6], 120
          %v337 = vld [vmem:[%s336] sm:$0xff]
          %v338 = vld [vmem:[%s336 + $0x8] sm:$0xff]
          %v339 = vld [vmem:[%s336 + $0x10] sm:$0xff]
          %v340 = vld [vmem:[%s336 + $0x18] sm:$0xff]
          %v341 = vld [vmem:[%s336 + $0x20] sm:$0xf]
          %v343 = vlaneseq
          %v344 = vshrl.u32 %v343, 7
          %v345 = vsub.s32 0, %v344
          %v346 = vrot.slane %v335, %v345
          %347 = vset.pattern.permute.xlu0 0
          %348 = vperm.xlu0 %347, %v346
          %v349 = vpop.permute.xlu0 %348
          %v351 = vmul.f32 %v349, %v337
          %v352 = vmul.f32 %v349, %v338
          %v353 = vmul.f32 %v349, %v339
          %v354 = vmul.f32 %v349, %v340
          %v355 = vmul.f32 %v349, %v341
          %v356 = vadd.f32 %v329, %v351
          %v357 = vadd.f32 %v330, %v352
          %v358 = vadd.f32 %v331, %v353
          %v359 = vadd.f32 %v332, %v354
          %v360 = vadd.f32 %v333, %v355
          %vm361 = vcmask 64512
          %362 = vst.msk [vmem:[#allocation2] sm:$0xff] %vm361, %v356
          %363 = vst.msk [vmem:[#allocation2 + $0x8] sm:$0xff] %vm361, %v357
          %364 = vst.msk [vmem:[#allocation2 + $0x10] sm:$0xff] %vm361, %v358
          %365 = vst.msk [vmem:[#allocation2 + $0x18] sm:$0xff] %vm361, %v359
          %vm366 = vcmask 60416
          %367 = vst.msk [vmem:[#allocation2 + $0x20] sm:$0xf] %vm366, %v360
        $region48: #{tpu_custom_call.1} parent=31 // pred_fallthru
          _
        %s368 = smul.u32 %s26, 16
        %s369 = smul.u32 %s368, 24
        %s370 = scalar_lea.vmem %s227, %s369 [#allocation8]
        %v371 = vld [vmem:[%s370] sm:$0xff]
        %v372 = vld [vmem:[%s370 + $0x8] sm:$0xff]
        %v373 = vld [vmem:[%s370 + $0x18] sm:$0xff]
        %v374 = vld [vmem:[%s370 + $0x20] sm:$0xff]
        %v375 = vld [vmem:[%s370 + $0x30] sm:$0xff]
        %v376 = vld [vmem:[%s370 + $0x38] sm:$0xff]
        %v377 = vld [vmem:[%s370 + $0x48] sm:$0xff]
        %v378 = vld [vmem:[%s370 + $0x50] sm:$0xff]
        %v379 = vld [vmem:[%s370 + $0x60] sm:$0xff]
        %v380 = vld [vmem:[%s370 + $0x68] sm:$0xff]
        %v381 = vld [vmem:[%s370 + $0x78] sm:$0xff]
        %v382 = vld [vmem:[%s370 + $0x80] sm:$0xff]
        %v383 = vld [vmem:[%s370 + $0x90] sm:$0xff]
        %v384 = vld [vmem:[%s370 + $0x98] sm:$0xff]
        %v385 = vld [vmem:[%s370 + $0xa8] sm:$0xff]
        %v386 = vld [vmem:[%s370 + $0xb0] sm:$0xff]
        %v387 = vld [vmem:[%s370 + $0xc0] sm:$0xff]
        %v388 = vld [vmem:[%s370 + $0xc8] sm:$0xff]
        %v389 = vld [vmem:[%s370 + $0xd8] sm:$0xff]
        %v390 = vld [vmem:[%s370 + $0xe0] sm:$0xff]
        %v391 = vld [vmem:[%s370 + $0xf0] sm:$0xff]
        %v392 = vld [vmem:[%s370 + $0xf8] sm:$0xff]
        %v393 = vld [vmem:[%s370 + $0x108] sm:$0xff]
        %v394 = vld [vmem:[%s370 + $0x110] sm:$0xff]
        %v395 = vld [vmem:[%s370 + $0x120] sm:$0xff]
        %v396 = vld [vmem:[%s370 + $0x128] sm:$0xff]
        %v397 = vld [vmem:[%s370 + $0x138] sm:$0xff]
        %v398 = vld [vmem:[%s370 + $0x140] sm:$0xff]
        %v399 = vld [vmem:[%s370 + $0x150] sm:$0xff]
        %v400 = vld [vmem:[%s370 + $0x158] sm:$0xff]
        %v401 = vld [vmem:[%s370 + $0x168] sm:$0xff]
        %v402 = vld [vmem:[%s370 + $0x170] sm:$0xff]
        %v403 = vld [vmem:[%s370 + $0x1] sm:$0xff]
        %v404 = vld [vmem:[%s370 + $0x9] sm:$0xff]
        %v405 = vld [vmem:[%s370 + $0x19] sm:$0xff]
        %v406 = vld [vmem:[%s370 + $0x21] sm:$0xff]
        %v407 = vld [vmem:[%s370 + $0x31] sm:$0xff]
        %v408 = vld [vmem:[%s370 + $0x39] sm:$0xff]
        %v409 = vld [vmem:[%s370 + $0x49] sm:$0xff]
        %v410 = vld [vmem:[%s370 + $0x51] sm:$0xff]
        %v411 = vld [vmem:[%s370 + $0x61] sm:$0xff]
        %v412 = vld [vmem:[%s370 + $0x69] sm:$0xff]
        %v413 = vld [vmem:[%s370 + $0x79] sm:$0xff]
        %v414 = vld [vmem:[%s370 + $0x81] sm:$0xff]
        %v415 = vld [vmem:[%s370 + $0x91] sm:$0xff]
        %v416 = vld [vmem:[%s370 + $0x99] sm:$0xff]
        %v417 = vld [vmem:[%s370 + $0xa9] sm:$0xff]
        %v418 = vld [vmem:[%s370 + $0xb1] sm:$0xff]
        %v419 = vld [vmem:[%s370 + $0xc1] sm:$0xff]
        %v420 = vld [vmem:[%s370 + $0xc9] sm:$0xff]
        %v421 = vld [vmem:[%s370 + $0xd9] sm:$0xff]
        %v422 = vld [vmem:[%s370 + $0xe1] sm:$0xff]
        %v423 = vld [vmem:[%s370 + $0xf1] sm:$0xff]
        %v424 = vld [vmem:[%s370 + $0xf9] sm:$0xff]
        %v425 = vld [vmem:[%s370 + $0x109] sm:$0xff]
        %v426 = vld [vmem:[%s370 + $0x111] sm:$0xff]
        %v427 = vld [vmem:[%s370 + $0x121] sm:$0xff]
        %v428 = vld [vmem:[%s370 + $0x129] sm:$0xff]
        %v429 = vld [vmem:[%s370 + $0x139] sm:$0xff]
        %v430 = vld [vmem:[%s370 + $0x141] sm:$0xff]
        %v431 = vld [vmem:[%s370 + $0x151] sm:$0xff]
        %v432 = vld [vmem:[%s370 + $0x159] sm:$0xff]
        %v433 = vld [vmem:[%s370 + $0x169] sm:$0xff]
        %v434 = vld [vmem:[%s370 + $0x171] sm:$0xff]
        %v435 = vld [vmem:[%s370 + $0x2] sm:$0xff]
        %v436 = vld [vmem:[%s370 + $0xa] sm:$0xff]
        %v437 = vld [vmem:[%s370 + $0x1a] sm:$0xff]
        %v438 = vld [vmem:[%s370 + $0x22] sm:$0xff]
        %v439 = vld [vmem:[%s370 + $0x32] sm:$0xff]
        %v440 = vld [vmem:[%s370 + $0x3a] sm:$0xff]
        %v441 = vld [vmem:[%s370 + $0x4a] sm:$0xff]
        %v442 = vld [vmem:[%s370 + $0x52] sm:$0xff]
        %v443 = vld [vmem:[%s370 + $0x62] sm:$0xff]
        %v444 = vld [vmem:[%s370 + $0x6a] sm:$0xff]
        %v445 = vld [vmem:[%s370 + $0x7a] sm:$0xff]
        %v446 = vld [vmem:[%s370 + $0x82] sm:$0xff]
        %v447 = vld [vmem:[%s370 + $0x92] sm:$0xff]
        %v448 = vld [vmem:[%s370 + $0x9a] sm:$0xff]
        %v449 = vld [vmem:[%s370 + $0xaa] sm:$0xff]
        %v450 = vld [vmem:[%s370 + $0xb2] sm:$0xff]
        %v451 = vld [vmem:[%s370 + $0xc2] sm:$0xff]
        %v452 = vld [vmem:[%s370 + $0xca] sm:$0xff]
        %v453 = vld [vmem:[%s370 + $0xda] sm:$0xff]
        %v454 = vld [vmem:[%s370 + $0xe2] sm:$0xff]
        %v455 = vld [vmem:[%s370 + $0xf2] sm:$0xff]
        %v456 = vld [vmem:[%s370 + $0xfa] sm:$0xff]
        %v457 = vld [vmem:[%s370 + $0x10a] sm:$0xff]
        %v458 = vld [vmem:[%s370 + $0x112] sm:$0xff]
        %v459 = vld [vmem:[%s370 + $0x122] sm:$0xff]
        %v460 = vld [vmem:[%s370 + $0x12a] sm:$0xff]
        %v461 = vld [vmem:[%s370 + $0x13a] sm:$0xff]
        %v462 = vld [vmem:[%s370 + $0x142] sm:$0xff]
        %v463 = vld [vmem:[%s370 + $0x152] sm:$0xff]
        %v464 = vld [vmem:[%s370 + $0x15a] sm:$0xff]
        %v465 = vld [vmem:[%s370 + $0x16a] sm:$0xff]
        %v466 = vld [vmem:[%s370 + $0x172] sm:$0xff]
        %s467 = sadd.s32 %s368, 1
        %s468 = smul.u32 %s467, 24
        %s469 = scalar_lea.vmem %s227, %s468 [#allocation8]
        %v470 = vld [vmem:[%s469] sm:$0xff]
        %v471 = vld [vmem:[%s469 + $0x8] sm:$0xff]
        %v472 = vld [vmem:[%s469 + $0x18] sm:$0xff]
        %v473 = vld [vmem:[%s469 + $0x20] sm:$0xff]
        %v474 = vld [vmem:[%s469 + $0x30] sm:$0xff]
        %v475 = vld [vmem:[%s469 + $0x38] sm:$0xff]
        %v476 = vld [vmem:[%s469 + $0x48] sm:$0xff]
        %v477 = vld [vmem:[%s469 + $0x50] sm:$0xff]
        %v478 = vld [vmem:[%s469 + $0x60] sm:$0xff]
        %v479 = vld [vmem:[%s469 + $0x68] sm:$0xff]
        %v480 = vld [vmem:[%s469 + $0x78] sm:$0xff]
        %v481 = vld [vmem:[%s469 + $0x80] sm:$0xff]
        %v482 = vld [vmem:[%s469 + $0x90] sm:$0xff]
        %v483 = vld [vmem:[%s469 + $0x98] sm:$0xff]
        %v484 = vld [vmem:[%s469 + $0xa8] sm:$0xff]
        %v485 = vld [vmem:[%s469 + $0xb0] sm:$0xff]
        %v486 = vld [vmem:[%s469 + $0xc0] sm:$0xff]
        %v487 = vld [vmem:[%s469 + $0xc8] sm:$0xff]
        %v488 = vld [vmem:[%s469 + $0xd8] sm:$0xff]
        %v489 = vld [vmem:[%s469 + $0xe0] sm:$0xff]
        %v490 = vld [vmem:[%s469 + $0xf0] sm:$0xff]
        %v491 = vld [vmem:[%s469 + $0xf8] sm:$0xff]
        %v492 = vld [vmem:[%s469 + $0x108] sm:$0xff]
        %v493 = vld [vmem:[%s469 + $0x110] sm:$0xff]
        %v494 = vld [vmem:[%s469 + $0x120] sm:$0xff]
        %v495 = vld [vmem:[%s469 + $0x128] sm:$0xff]
        %v496 = vld [vmem:[%s469 + $0x138] sm:$0xff]
        %v497 = vld [vmem:[%s469 + $0x140] sm:$0xff]
        %v498 = vld [vmem:[%s469 + $0x150] sm:$0xff]
        %v499 = vld [vmem:[%s469 + $0x158] sm:$0xff]
        %v500 = vld [vmem:[%s469 + $0x168] sm:$0xff]
        %v501 = vld [vmem:[%s469 + $0x170] sm:$0xff]
        %v502 = vld [vmem:[%s469 + $0x1] sm:$0xff]
        %v503 = vld [vmem:[%s469 + $0x9] sm:$0xff]
        %v504 = vld [vmem:[%s469 + $0x19] sm:$0xff]
        %v505 = vld [vmem:[%s469 + $0x21] sm:$0xff]
        %v506 = vld [vmem:[%s469 + $0x31] sm:$0xff]
        %v507 = vld [vmem:[%s469 + $0x39] sm:$0xff]
        %v508 = vld [vmem:[%s469 + $0x49] sm:$0xff]
        %v509 = vld [vmem:[%s469 + $0x51] sm:$0xff]
        %v510 = vld [vmem:[%s469 + $0x61] sm:$0xff]
        %v511 = vld [vmem:[%s469 + $0x69] sm:$0xff]
        %v512 = vld [vmem:[%s469 + $0x79] sm:$0xff]
        %v513 = vld [vmem:[%s469 + $0x81] sm:$0xff]
        %v514 = vld [vmem:[%s469 + $0x91] sm:$0xff]
        %v515 = vld [vmem:[%s469 + $0x99] sm:$0xff]
        %v516 = vld [vmem:[%s469 + $0xa9] sm:$0xff]
        %v517 = vld [vmem:[%s469 + $0xb1] sm:$0xff]
        %v518 = vld [vmem:[%s469 + $0xc1] sm:$0xff]
        %v519 = vld [vmem:[%s469 + $0xc9] sm:$0xff]
        %v520 = vld [vmem:[%s469 + $0xd9] sm:$0xff]
        %v521 = vld [vmem:[%s469 + $0xe1] sm:$0xff]
        %v522 = vld [vmem:[%s469 + $0xf1] sm:$0xff]
        %v523 = vld [vmem:[%s469 + $0xf9] sm:$0xff]
        %v524 = vld [vmem:[%s469 + $0x109] sm:$0xff]
        %v525 = vld [vmem:[%s469 + $0x111] sm:$0xff]
        %v526 = vld [vmem:[%s469 + $0x121] sm:$0xff]
        %v527 = vld [vmem:[%s469 + $0x129] sm:$0xff]
        %v528 = vld [vmem:[%s469 + $0x139] sm:$0xff]
        %v529 = vld [vmem:[%s469 + $0x141] sm:$0xff]
        %v530 = vld [vmem:[%s469 + $0x151] sm:$0xff]
        %v531 = vld [vmem:[%s469 + $0x159] sm:$0xff]
        %v532 = vld [vmem:[%s469 + $0x169] sm:$0xff]
        %v533 = vld [vmem:[%s469 + $0x171] sm:$0xff]
        %v534 = vld [vmem:[%s469 + $0x2] sm:$0xff]
        %v535 = vld [vmem:[%s469 + $0xa] sm:$0xff]
        %v536 = vld [vmem:[%s469 + $0x1a] sm:$0xff]
        %v537 = vld [vmem:[%s469 + $0x22] sm:$0xff]
        %v538 = vld [vmem:[%s469 + $0x32] sm:$0xff]
        %v539 = vld [vmem:[%s469 + $0x3a] sm:$0xff]
        %v540 = vld [vmem:[%s469 + $0x4a] sm:$0xff]
        %v541 = vld [vmem:[%s469 + $0x52] sm:$0xff]
        %v542 = vld [vmem:[%s469 + $0x62] sm:$0xff]
        %v543 = vld [vmem:[%s469 + $0x6a] sm:$0xff]
        %v544 = vld [vmem:[%s469 + $0x7a] sm:$0xff]
        %v545 = vld [vmem:[%s469 + $0x82] sm:$0xff]
        %v546 = vld [vmem:[%s469 + $0x92] sm:$0xff]
        %v547 = vld [vmem:[%s469 + $0x9a] sm:$0xff]
        %v548 = vld [vmem:[%s469 + $0xaa] sm:$0xff]
        %v549 = vld [vmem:[%s469 + $0xb2] sm:$0xff]
        %v550 = vld [vmem:[%s469 + $0xc2] sm:$0xff]
        %v551 = vld [vmem:[%s469 + $0xca] sm:$0xff]
        %v552 = vld [vmem:[%s469 + $0xda] sm:$0xff]
        %v553 = vld [vmem:[%s469 + $0xe2] sm:$0xff]
        %v554 = vld [vmem:[%s469 + $0xf2] sm:$0xff]
        %v555 = vld [vmem:[%s469 + $0xfa] sm:$0xff]
        %v556 = vld [vmem:[%s469 + $0x10a] sm:$0xff]
        %v557 = vld [vmem:[%s469 + $0x112] sm:$0xff]
        %v558 = vld [vmem:[%s469 + $0x122] sm:$0xff]
        %v559 = vld [vmem:[%s469 + $0x12a] sm:$0xff]
        %v560 = vld [vmem:[%s469 + $0x13a] sm:$0xff]
        %v561 = vld [vmem:[%s469 + $0x142] sm:$0xff]
        %v562 = vld [vmem:[%s469 + $0x152] sm:$0xff]
        %v563 = vld [vmem:[%s469 + $0x15a] sm:$0xff]
        %v564 = vld [vmem:[%s469 + $0x16a] sm:$0xff]
        %v565 = vld [vmem:[%s469 + $0x172] sm:$0xff]
        %s566 = sadd.s32 %s368, 2
        %s567 = smul.u32 %s566, 24
        %s568 = scalar_lea.vmem %s227, %s567 [#allocation8]
        %v569 = vld [vmem:[%s568] sm:$0xff]
        %v570 = vld [vmem:[%s568 + $0x8] sm:$0xff]
        %v571 = vld [vmem:[%s568 + $0x18] sm:$0xff]
        %v572 = vld [vmem:[%s568 + $0x20] sm:$0xff]
        %v573 = vld [vmem:[%s568 + $0x30] sm:$0xff]
        %v574 = vld [vmem:[%s568 + $0x38] sm:$0xff]
        %v575 = vld [vmem:[%s568 + $0x48] sm:$0xff]
        %v576 = vld [vmem:[%s568 + $0x50] sm:$0xff]
        %v577 = vld [vmem:[%s568 + $0x60] sm:$0xff]
        %v578 = vld [vmem:[%s568 + $0x68] sm:$0xff]
        %v579 = vld [vmem:[%s568 + $0x78] sm:$0xff]
        %v580 = vld [vmem:[%s568 + $0x80] sm:$0xff]
        %v581 = vld [vmem:[%s568 + $0x90] sm:$0xff]
        %v582 = vld [vmem:[%s568 + $0x98] sm:$0xff]
        %v583 = vld [vmem:[%s568 + $0xa8] sm:$0xff]
        %v584 = vld [vmem:[%s568 + $0xb0] sm:$0xff]
        %v585 = vld [vmem:[%s568 + $0xc0] sm:$0xff]
        %v586 = vld [vmem:[%s568 + $0xc8] sm:$0xff]
        %v587 = vld [vmem:[%s568 + $0xd8] sm:$0xff]
        %v588 = vld [vmem:[%s568 + $0xe0] sm:$0xff]
        %v589 = vld [vmem:[%s568 + $0xf0] sm:$0xff]
        %v590 = vld [vmem:[%s568 + $0xf8] sm:$0xff]
        %v591 = vld [vmem:[%s568 + $0x108] sm:$0xff]
        %v592 = vld [vmem:[%s568 + $0x110] sm:$0xff]
        %v593 = vld [vmem:[%s568 + $0x120] sm:$0xff]
        %v594 = vld [vmem:[%s568 + $0x128] sm:$0xff]
        %v595 = vld [vmem:[%s568 + $0x138] sm:$0xff]
        %v596 = vld [vmem:[%s568 + $0x140] sm:$0xff]
        %v597 = vld [vmem:[%s568 + $0x150] sm:$0xff]
        %v598 = vld [vmem:[%s568 + $0x158] sm:$0xff]
        %v599 = vld [vmem:[%s568 + $0x168] sm:$0xff]
        %v600 = vld [vmem:[%s568 + $0x170] sm:$0xff]
        %v601 = vld [vmem:[%s568 + $0x1] sm:$0xff]
        %v602 = vld [vmem:[%s568 + $0x9] sm:$0xff]
        %v603 = vld [vmem:[%s568 + $0x19] sm:$0xff]
        %v604 = vld [vmem:[%s568 + $0x21] sm:$0xff]
        %v605 = vld [vmem:[%s568 + $0x31] sm:$0xff]
        %v606 = vld [vmem:[%s568 + $0x39] sm:$0xff]
        %v607 = vld [vmem:[%s568 + $0x49] sm:$0xff]
        %v608 = vld [vmem:[%s568 + $0x51] sm:$0xff]
        %v609 = vld [vmem:[%s568 + $0x61] sm:$0xff]
        %v610 = vld [vmem:[%s568 + $0x69] sm:$0xff]
        %v611 = vld [vmem:[%s568 + $0x79] sm:$0xff]
        %v612 = vld [vmem:[%s568 + $0x81] sm:$0xff]
        %v613 = vld [vmem:[%s568 + $0x91] sm:$0xff]
        %v614 = vld [vmem:[%s568 + $0x99] sm:$0xff]
        %v615 = vld [vmem:[%s568 + $0xa9] sm:$0xff]
        %v616 = vld [vmem:[%s568 + $0xb1] sm:$0xff]
        %v617 = vld [vmem:[%s568 + $0xc1] sm:$0xff]
        %v618 = vld [vmem:[%s568 + $0xc9] sm:$0xff]
        %v619 = vld [vmem:[%s568 + $0xd9] sm:$0xff]
        %v620 = vld [vmem:[%s568 + $0xe1] sm:$0xff]
        %v621 = vld [vmem:[%s568 + $0xf1] sm:$0xff]
        %v622 = vld [vmem:[%s568 + $0xf9] sm:$0xff]
        %v623 = vld [vmem:[%s568 + $0x109] sm:$0xff]
        %v624 = vld [vmem:[%s568 + $0x111] sm:$0xff]
        %v625 = vld [vmem:[%s568 + $0x121] sm:$0xff]
        %v626 = vld [vmem:[%s568 + $0x129] sm:$0xff]
        %v627 = vld [vmem:[%s568 + $0x139] sm:$0xff]
        %v628 = vld [vmem:[%s568 + $0x141] sm:$0xff]
        %v629 = vld [vmem:[%s568 + $0x151] sm:$0xff]
        %v630 = vld [vmem:[%s568 + $0x159] sm:$0xff]
        %v631 = vld [vmem:[%s568 + $0x169] sm:$0xff]
        %v632 = vld [vmem:[%s568 + $0x171] sm:$0xff]
        %v633 = vld [vmem:[%s568 + $0x2] sm:$0xff]
        %v634 = vld [vmem:[%s568 + $0xa] sm:$0xff]
        %v635 = vld [vmem:[%s568 + $0x1a] sm:$0xff]
        %v636 = vld [vmem:[%s568 + $0x22] sm:$0xff]
        %v637 = vld [vmem:[%s568 + $0x32] sm:$0xff]
        %v638 = vld [vmem:[%s568 + $0x3a] sm:$0xff]
        %v639 = vld [vmem:[%s568 + $0x4a] sm:$0xff]
        %v640 = vld [vmem:[%s568 + $0x52] sm:$0xff]
        %v641 = vld [vmem:[%s568 + $0x62] sm:$0xff]
        %v642 = vld [vmem:[%s568 + $0x6a] sm:$0xff]
        %v643 = vld [vmem:[%s568 + $0x7a] sm:$0xff]
        %v644 = vld [vmem:[%s568 + $0x82] sm:$0xff]
        %v645 = vld [vmem:[%s568 + $0x92] sm:$0xff]
        %v646 = vld [vmem:[%s568 + $0x9a] sm:$0xff]
        %v647 = vld [vmem:[%s568 + $0xaa] sm:$0xff]
        %v648 = vld [vmem:[%s568 + $0xb2] sm:$0xff]
        %v649 = vld [vmem:[%s568 + $0xc2] sm:$0xff]
        %v650 = vld [vmem:[%s568 + $0xca] sm:$0xff]
        %v651 = vld [vmem:[%s568 + $0xda] sm:$0xff]
        %v652 = vld [vmem:[%s568 + $0xe2] sm:$0xff]
        %v653 = vld [vmem:[%s568 + $0xf2] sm:$0xff]
        %v654 = vld [vmem:[%s568 + $0xfa] sm:$0xff]
        %v655 = vld [vmem:[%s568 + $0x10a] sm:$0xff]
        %v656 = vld [vmem:[%s568 + $0x112] sm:$0xff]
        %v657 = vld [vmem:[%s568 + $0x122] sm:$0xff]
        %v658 = vld [vmem:[%s568 + $0x12a] sm:$0xff]
        %v659 = vld [vmem:[%s568 + $0x13a] sm:$0xff]
        %v660 = vld [vmem:[%s568 + $0x142] sm:$0xff]
        %v661 = vld [vmem:[%s568 + $0x152] sm:$0xff]
        %v662 = vld [vmem:[%s568 + $0x15a] sm:$0xff]
        %v663 = vld [vmem:[%s568 + $0x16a] sm:$0xff]
        %v664 = vld [vmem:[%s568 + $0x172] sm:$0xff]
        %697 = vrot.lane.b32.xlu0 %v403, 4
        %v698 = vpop.permute.xlu0 %697
        %699 = vrot.lane.b32.xlu0 %v404, 4
        %v700 = vpop.permute.xlu0 %699
        %701 = vrot.lane.b32.xlu0 %v405, 4
        %v702 = vpop.permute.xlu0 %701
        %703 = vrot.lane.b32.xlu0 %v406, 4
        %v704 = vpop.permute.xlu0 %703
        %705 = vrot.lane.b32.xlu0 %v407, 4
        %v706 = vpop.permute.xlu0 %705
        %707 = vrot.lane.b32.xlu0 %v408, 4
        %v708 = vpop.permute.xlu0 %707
        %709 = vrot.lane.b32.xlu0 %v409, 4
        %v710 = vpop.permute.xlu0 %709
        %711 = vrot.lane.b32.xlu0 %v410, 4
        %v712 = vpop.permute.xlu0 %711
        %713 = vrot.lane.b32.xlu0 %v411, 4
        %v714 = vpop.permute.xlu0 %713
        %715 = vrot.lane.b32.xlu0 %v412, 4
        %v716 = vpop.permute.xlu0 %715
        %717 = vrot.lane.b32.xlu0 %v413, 4
        %v718 = vpop.permute.xlu0 %717
        %719 = vrot.lane.b32.xlu0 %v414, 4
        %v720 = vpop.permute.xlu0 %719
        %721 = vrot.lane.b32.xlu0 %v415, 4
        %v722 = vpop.permute.xlu0 %721
        %723 = vrot.lane.b32.xlu0 %v416, 4
        %v724 = vpop.permute.xlu0 %723
        %725 = vrot.lane.b32.xlu0 %v417, 4
        %v726 = vpop.permute.xlu0 %725
        %727 = vrot.lane.b32.xlu0 %v418, 4
        %v728 = vpop.permute.xlu0 %727
        %729 = vrot.lane.b32.xlu0 %v419, 4
        %v730 = vpop.permute.xlu0 %729
        %731 = vrot.lane.b32.xlu0 %v420, 4
        %v732 = vpop.permute.xlu0 %731
        %733 = vrot.lane.b32.xlu0 %v421, 4
        %v734 = vpop.permute.xlu0 %733
        %735 = vrot.lane.b32.xlu0 %v422, 4
        %v736 = vpop.permute.xlu0 %735
        %737 = vrot.lane.b32.xlu0 %v423, 4
        %v738 = vpop.permute.xlu0 %737
        %739 = vrot.lane.b32.xlu0 %v424, 4
        %v740 = vpop.permute.xlu0 %739
        %741 = vrot.lane.b32.xlu0 %v425, 4
        %v742 = vpop.permute.xlu0 %741
        %743 = vrot.lane.b32.xlu0 %v426, 4
        %v744 = vpop.permute.xlu0 %743
        %745 = vrot.lane.b32.xlu0 %v427, 4
        %v746 = vpop.permute.xlu0 %745
        %747 = vrot.lane.b32.xlu0 %v428, 4
        %v748 = vpop.permute.xlu0 %747
        %749 = vrot.lane.b32.xlu0 %v429, 4
        %v750 = vpop.permute.xlu0 %749
        %751 = vrot.lane.b32.xlu0 %v430, 4
        %v752 = vpop.permute.xlu0 %751
        %753 = vrot.lane.b32.xlu0 %v431, 4
        %v754 = vpop.permute.xlu0 %753
        %755 = vrot.lane.b32.xlu0 %v432, 4
        %v756 = vpop.permute.xlu0 %755
        %757 = vrot.lane.b32.xlu0 %v433, 4
        %v758 = vpop.permute.xlu0 %757
        %759 = vrot.lane.b32.xlu0 %v434, 4
        %v760 = vpop.permute.xlu0 %759
        %825 = vrot.lane.b32.xlu0 %v435, 8
        %v826 = vpop.permute.xlu0 %825
        %827 = vrot.lane.b32.xlu0 %v436, 8
        %v828 = vpop.permute.xlu0 %827
        %829 = vrot.lane.b32.xlu0 %v437, 8
        %v830 = vpop.permute.xlu0 %829
        %831 = vrot.lane.b32.xlu0 %v438, 8
        %v832 = vpop.permute.xlu0 %831
        %833 = vrot.lane.b32.xlu0 %v439, 8
        %v834 = vpop.permute.xlu0 %833
        %835 = vrot.lane.b32.xlu0 %v440, 8
        %v836 = vpop.permute.xlu0 %835
        %837 = vrot.lane.b32.xlu0 %v441, 8
        %v838 = vpop.permute.xlu0 %837
        %839 = vrot.lane.b32.xlu0 %v442, 8
        %v840 = vpop.permute.xlu0 %839
        %841 = vrot.lane.b32.xlu0 %v443, 8
        %v842 = vpop.permute.xlu0 %841
        %843 = vrot.lane.b32.xlu0 %v444, 8
        %v844 = vpop.permute.xlu0 %843
        %845 = vrot.lane.b32.xlu0 %v445, 8
        %v846 = vpop.permute.xlu0 %845
        %847 = vrot.lane.b32.xlu0 %v446, 8
        %v848 = vpop.permute.xlu0 %847
        %849 = vrot.lane.b32.xlu0 %v447, 8
        %v850 = vpop.permute.xlu0 %849
        %851 = vrot.lane.b32.xlu0 %v448, 8
        %v852 = vpop.permute.xlu0 %851
        %853 = vrot.lane.b32.xlu0 %v449, 8
        %v854 = vpop.permute.xlu0 %853
        %855 = vrot.lane.b32.xlu0 %v450, 8
        %v856 = vpop.permute.xlu0 %855
        %857 = vrot.lane.b32.xlu0 %v451, 8
        %v858 = vpop.permute.xlu0 %857
        %859 = vrot.lane.b32.xlu0 %v452, 8
        %v860 = vpop.permute.xlu0 %859
        %861 = vrot.lane.b32.xlu0 %v453, 8
        %v862 = vpop.permute.xlu0 %861
        %863 = vrot.lane.b32.xlu0 %v454, 8
        %v864 = vpop.permute.xlu0 %863
        %865 = vrot.lane.b32.xlu0 %v455, 8
        %v866 = vpop.permute.xlu0 %865
        %867 = vrot.lane.b32.xlu0 %v456, 8
        %v868 = vpop.permute.xlu0 %867
        %869 = vrot.lane.b32.xlu0 %v457, 8
        %v870 = vpop.permute.xlu0 %869
        %871 = vrot.lane.b32.xlu0 %v458, 8
        %v872 = vpop.permute.xlu0 %871
        %873 = vrot.lane.b32.xlu0 %v459, 8
        %v874 = vpop.permute.xlu0 %873
        %875 = vrot.lane.b32.xlu0 %v460, 8
        %v876 = vpop.permute.xlu0 %875
        %877 = vrot.lane.b32.xlu0 %v461, 8
        %v878 = vpop.permute.xlu0 %877
        %879 = vrot.lane.b32.xlu0 %v462, 8
        %v880 = vpop.permute.xlu0 %879
        %881 = vrot.lane.b32.xlu0 %v463, 8
        %v882 = vpop.permute.xlu0 %881
        %883 = vrot.lane.b32.xlu0 %v464, 8
        %v884 = vpop.permute.xlu0 %883
        %885 = vrot.lane.b32.xlu0 %v465, 8
        %v886 = vpop.permute.xlu0 %885
        %887 = vrot.lane.b32.xlu0 %v466, 8
        %v888 = vpop.permute.xlu0 %887
        %953 = vrot.lane.b32.xlu0 %v470, 12
        %v954 = vpop.permute.xlu0 %953
        %955 = vrot.lane.b32.xlu0 %v471, 12
        %v956 = vpop.permute.xlu0 %955
        %957 = vrot.lane.b32.xlu0 %v472, 12
        %v958 = vpop.permute.xlu0 %957
        %959 = vrot.lane.b32.xlu0 %v473, 12
        %v960 = vpop.permute.xlu0 %959
        %961 = vrot.lane.b32.xlu0 %v474, 12
        %v962 = vpop.permute.xlu0 %961
        %963 = vrot.lane.b32.xlu0 %v475, 12
        %v964 = vpop.permute.xlu0 %963
        %965 = vrot.lane.b32.xlu0 %v476, 12
        %v966 = vpop.permute.xlu0 %965
        %967 = vrot.lane.b32.xlu0 %v477, 12
        %v968 = vpop.permute.xlu0 %967
        %969 = vrot.lane.b32.xlu0 %v478, 12
        %v970 = vpop.permute.xlu0 %969
        %971 = vrot.lane.b32.xlu0 %v479, 12
        %v972 = vpop.permute.xlu0 %971
        %973 = vrot.lane.b32.xlu0 %v480, 12
        %v974 = vpop.permute.xlu0 %973
        %975 = vrot.lane.b32.xlu0 %v481, 12
        %v976 = vpop.permute.xlu0 %975
        %977 = vrot.lane.b32.xlu0 %v482, 12
        %v978 = vpop.permute.xlu0 %977
        %979 = vrot.lane.b32.xlu0 %v483, 12
        %v980 = vpop.permute.xlu0 %979
        %981 = vrot.lane.b32.xlu0 %v484, 12
        %v982 = vpop.permute.xlu0 %981
        %983 = vrot.lane.b32.xlu0 %v485, 12
        %v984 = vpop.permute.xlu0 %983
        %985 = vrot.lane.b32.xlu0 %v486, 12
        %v986 = vpop.permute.xlu0 %985
        %987 = vrot.lane.b32.xlu0 %v487, 12
        %v988 = vpop.permute.xlu0 %987
        %989 = vrot.lane.b32.xlu0 %v488, 12
        %v990 = vpop.permute.xlu0 %989
        %991 = vrot.lane.b32.xlu0 %v489, 12
        %v992 = vpop.permute.xlu0 %991
        %993 = vrot.lane.b32.xlu0 %v490, 12
        %v994 = vpop.permute.xlu0 %993
        %995 = vrot.lane.b32.xlu0 %v491, 12
        %v996 = vpop.permute.xlu0 %995
        %997 = vrot.lane.b32.xlu0 %v492, 12
        %v998 = vpop.permute.xlu0 %997
        %999 = vrot.lane.b32.xlu0 %v493, 12
        %v1000 = vpop.permute.xlu0 %999
        %1001 = vrot.lane.b32.xlu0 %v494, 12
        %v1002 = vpop.permute.xlu0 %1001
        %1003 = vrot.lane.b32.xlu0 %v495, 12
        %v1004 = vpop.permute.xlu0 %1003
        %1005 = vrot.lane.b32.xlu0 %v496, 12
        %v1006 = vpop.permute.xlu0 %1005
        %1007 = vrot.lane.b32.xlu0 %v497, 12
        %v1008 = vpop.permute.xlu0 %1007
        %1009 = vrot.lane.b32.xlu0 %v498, 12
        %v1010 = vpop.permute.xlu0 %1009
        %1011 = vrot.lane.b32.xlu0 %v499, 12
        %v1012 = vpop.permute.xlu0 %1011
        %1013 = vrot.lane.b32.xlu0 %v500, 12
        %v1014 = vpop.permute.xlu0 %1013
        %1015 = vrot.lane.b32.xlu0 %v501, 12
        %v1016 = vpop.permute.xlu0 %1015
        %1081 = vrot.lane.b32.xlu0 %v502, 16
        %v1082 = vpop.permute.xlu0 %1081
        %1083 = vrot.lane.b32.xlu0 %v503, 16
        %v1084 = vpop.permute.xlu0 %1083
        %1085 = vrot.lane.b32.xlu0 %v504, 16
        %v1086 = vpop.permute.xlu0 %1085
        %1087 = vrot.lane.b32.xlu0 %v505, 16
        %v1088 = vpop.permute.xlu0 %1087
        %1089 = vrot.lane.b32.xlu0 %v506, 16
        %v1090 = vpop.permute.xlu0 %1089
        %1091 = vrot.lane.b32.xlu0 %v507, 16
        %v1092 = vpop.permute.xlu0 %1091
        %1093 = vrot.lane.b32.xlu0 %v508, 16
        %v1094 = vpop.permute.xlu0 %1093
        %1095 = vrot.lane.b32.xlu0 %v509, 16
        %v1096 = vpop.permute.xlu0 %1095
        %1097 = vrot.lane.b32.xlu0 %v510, 16
        %v1098 = vpop.permute.xlu0 %1097
        %1099 = vrot.lane.b32.xlu0 %v511, 16
        %v1100 = vpop.permute.xlu0 %1099
        %1101 = vrot.lane.b32.xlu0 %v512, 16
        %v1102 = vpop.permute.xlu0 %1101
        %1103 = vrot.lane.b32.xlu0 %v513, 16
        %v1104 = vpop.permute.xlu0 %1103
        %1105 = vrot.lane.b32.xlu0 %v514, 16
        %v1106 = vpop.permute.xlu0 %1105
        %1107 = vrot.lane.b32.xlu0 %v515, 16
        %v1108 = vpop.permute.xlu0 %1107
        %1109 = vrot.lane.b32.xlu0 %v516, 16
        %v1110 = vpop.permute.xlu0 %1109
        %1111 = vrot.lane.b32.xlu0 %v517, 16
        %v1112 = vpop.permute.xlu0 %1111
        %1113 = vrot.lane.b32.xlu0 %v518, 16
        %v1114 = vpop.permute.xlu0 %1113
        %1115 = vrot.lane.b32.xlu0 %v519, 16
        %v1116 = vpop.permute.xlu0 %1115
        %1117 = vrot.lane.b32.xlu0 %v520, 16
        %v1118 = vpop.permute.xlu0 %1117
        %1119 = vrot.lane.b32.xlu0 %v521, 16
        %v1120 = vpop.permute.xlu0 %1119
        %1121 = vrot.lane.b32.xlu0 %v522, 16
        %v1122 = vpop.permute.xlu0 %1121
        %1123 = vrot.lane.b32.xlu0 %v523, 16
        %v1124 = vpop.permute.xlu0 %1123
        %1125 = vrot.lane.b32.xlu0 %v524, 16
        %v1126 = vpop.permute.xlu0 %1125
        %1127 = vrot.lane.b32.xlu0 %v525, 16
        %v1128 = vpop.permute.xlu0 %1127
        %1129 = vrot.lane.b32.xlu0 %v526, 16
        %v1130 = vpop.permute.xlu0 %1129
        %1131 = vrot.lane.b32.xlu0 %v527, 16
        %v1132 = vpop.permute.xlu0 %1131
        %1133 = vrot.lane.b32.xlu0 %v528, 16
        %v1134 = vpop.permute.xlu0 %1133
        %1135 = vrot.lane.b32.xlu0 %v529, 16
        %v1136 = vpop.permute.xlu0 %1135
        %1137 = vrot.lane.b32.xlu0 %v530, 16
        %v1138 = vpop.permute.xlu0 %1137
        %1139 = vrot.lane.b32.xlu0 %v531, 16
        %v1140 = vpop.permute.xlu0 %1139
        %1141 = vrot.lane.b32.xlu0 %v532, 16
        %v1142 = vpop.permute.xlu0 %1141
        %1143 = vrot.lane.b32.xlu0 %v533, 16
        %v1144 = vpop.permute.xlu0 %1143
        %1209 = vrot.lane.b32.xlu0 %v534, 20
        %v1210 = vpop.permute.xlu0 %1209
        %1211 = vrot.lane.b32.xlu0 %v535, 20
        %v1212 = vpop.permute.xlu0 %1211
        %1213 = vrot.lane.b32.xlu0 %v536, 20
        %v1214 = vpop.permute.xlu0 %1213
        %1215 = vrot.lane.b32.xlu0 %v537, 20
        %v1216 = vpop.permute.xlu0 %1215
        %1217 = vrot.lane.b32.xlu0 %v538, 20
        %v1218 = vpop.permute.xlu0 %1217
        %1219 = vrot.lane.b32.xlu0 %v539, 20
        %v1220 = vpop.permute.xlu0 %1219
        %1221 = vrot.lane.b32.xlu0 %v540, 20
        %v1222 = vpop.permute.xlu0 %1221
        %1223 = vrot.lane.b32.xlu0 %v541, 20
        %v1224 = vpop.permute.xlu0 %1223
        %1225 = vrot.lane.b32.xlu0 %v542, 20
        %v1226 = vpop.permute.xlu0 %1225
        %1227 = vrot.lane.b32.xlu0 %v543, 20
        %v1228 = vpop.permute.xlu0 %1227
        %1229 = vrot.lane.b32.xlu0 %v544, 20
        %v1230 = vpop.permute.xlu0 %1229
        %1231 = vrot.lane.b32.xlu0 %v545, 20
        %v1232 = vpop.permute.xlu0 %1231
        %1233 = vrot.lane.b32.xlu0 %v546, 20
        %v1234 = vpop.permute.xlu0 %1233
        %1235 = vrot.lane.b32.xlu0 %v547, 20
        %v1236 = vpop.permute.xlu0 %1235
        %1237 = vrot.lane.b32.xlu0 %v548, 20
        %v1238 = vpop.permute.xlu0 %1237
        %1239 = vrot.lane.b32.xlu0 %v549, 20
        %v1240 = vpop.permute.xlu0 %1239
        %1241 = vrot.lane.b32.xlu0 %v550, 20
        %v1242 = vpop.permute.xlu0 %1241
        %1243 = vrot.lane.b32.xlu0 %v551, 20
        %v1244 = vpop.permute.xlu0 %1243
        %1245 = vrot.lane.b32.xlu0 %v552, 20
        %v1246 = vpop.permute.xlu0 %1245
        %1247 = vrot.lane.b32.xlu0 %v553, 20
        %v1248 = vpop.permute.xlu0 %1247
        %1249 = vrot.lane.b32.xlu0 %v554, 20
        %v1250 = vpop.permute.xlu0 %1249
        %1251 = vrot.lane.b32.xlu0 %v555, 20
        %v1252 = vpop.permute.xlu0 %1251
        %1253 = vrot.lane.b32.xlu0 %v556, 20
        %v1254 = vpop.permute.xlu0 %1253
        %1255 = vrot.lane.b32.xlu0 %v557, 20
        %v1256 = vpop.permute.xlu0 %1255
        %1257 = vrot.lane.b32.xlu0 %v558, 20
        %v1258 = vpop.permute.xlu0 %1257
        %1259 = vrot.lane.b32.xlu0 %v559, 20
        %v1260 = vpop.permute.xlu0 %1259
        %1261 = vrot.lane.b32.xlu0 %v560, 20
        %v1262 = vpop.permute.xlu0 %1261
        %1263 = vrot.lane.b32.xlu0 %v561, 20
        %v1264 = vpop.permute.xlu0 %1263
        %1265 = vrot.lane.b32.xlu0 %v562, 20
        %v1266 = vpop.permute.xlu0 %1265
        %1267 = vrot.lane.b32.xlu0 %v563, 20
        %v1268 = vpop.permute.xlu0 %1267
        %1269 = vrot.lane.b32.xlu0 %v564, 20
        %v1270 = vpop.permute.xlu0 %1269
        %1271 = vrot.lane.b32.xlu0 %v565, 20
        %v1272 = vpop.permute.xlu0 %1271
        %1337 = vrot.lane.b32.xlu0 %v569, 24
        %v1338 = vpop.permute.xlu0 %1337
        %1339 = vrot.lane.b32.xlu0 %v570, 24
        %v1340 = vpop.permute.xlu0 %1339
        %1341 = vrot.lane.b32.xlu0 %v571, 24
        %v1342 = vpop.permute.xlu0 %1341
        %1343 = vrot.lane.b32.xlu0 %v572, 24
        %v1344 = vpop.permute.xlu0 %1343
        %1345 = vrot.lane.b32.xlu0 %v573, 24
        %v1346 = vpop.permute.xlu0 %1345
        %1347 = vrot.lane.b32.xlu0 %v574, 24
        %v1348 = vpop.permute.xlu0 %1347
        %1349 = vrot.lane.b32.xlu0 %v575, 24
        %v1350 = vpop.permute.xlu0 %1349
        %1351 = vrot.lane.b32.xlu0 %v576, 24
        %v1352 = vpop.permute.xlu0 %1351
        %1353 = vrot.lane.b32.xlu0 %v577, 24
        %v1354 = vpop.permute.xlu0 %1353
        %1355 = vrot.lane.b32.xlu0 %v578, 24
        %v1356 = vpop.permute.xlu0 %1355
        %1357 = vrot.lane.b32.xlu0 %v579, 24
        %v1358 = vpop.permute.xlu0 %1357
        %1359 = vrot.lane.b32.xlu0 %v580, 24
        %v1360 = vpop.permute.xlu0 %1359
        %1361 = vrot.lane.b32.xlu0 %v581, 24
        %v1362 = vpop.permute.xlu0 %1361
        %1363 = vrot.lane.b32.xlu0 %v582, 24
        %v1364 = vpop.permute.xlu0 %1363
        %1365 = vrot.lane.b32.xlu0 %v583, 24
        %v1366 = vpop.permute.xlu0 %1365
        %1367 = vrot.lane.b32.xlu0 %v584, 24
        %v1368 = vpop.permute.xlu0 %1367
        %1369 = vrot.lane.b32.xlu0 %v585, 24
        %v1370 = vpop.permute.xlu0 %1369
        %1371 = vrot.lane.b32.xlu0 %v586, 24
        %v1372 = vpop.permute.xlu0 %1371
        %1373 = vrot.lane.b32.xlu0 %v587, 24
        %v1374 = vpop.permute.xlu0 %1373
        %1375 = vrot.lane.b32.xlu0 %v588, 24
        %v1376 = vpop.permute.xlu0 %1375
        %1377 = vrot.lane.b32.xlu0 %v589, 24
        %v1378 = vpop.permute.xlu0 %1377
        %1379 = vrot.lane.b32.xlu0 %v590, 24
        %v1380 = vpop.permute.xlu0 %1379
        %1381 = vrot.lane.b32.xlu0 %v591, 24
        %v1382 = vpop.permute.xlu0 %1381
        %1383 = vrot.lane.b32.xlu0 %v592, 24
        %v1384 = vpop.permute.xlu0 %1383
        %1385 = vrot.lane.b32.xlu0 %v593, 24
        %v1386 = vpop.permute.xlu0 %1385
        %1387 = vrot.lane.b32.xlu0 %v594, 24
        %v1388 = vpop.permute.xlu0 %1387
        %1389 = vrot.lane.b32.xlu0 %v595, 24
        %v1390 = vpop.permute.xlu0 %1389
        %1391 = vrot.lane.b32.xlu0 %v596, 24
        %v1392 = vpop.permute.xlu0 %1391
        %1393 = vrot.lane.b32.xlu0 %v597, 24
        %v1394 = vpop.permute.xlu0 %1393
        %1395 = vrot.lane.b32.xlu0 %v598, 24
        %v1396 = vpop.permute.xlu0 %1395
        %1397 = vrot.lane.b32.xlu0 %v599, 24
        %v1398 = vpop.permute.xlu0 %1397
        %1399 = vrot.lane.b32.xlu0 %v600, 24
        %v1400 = vpop.permute.xlu0 %1399
        %1465 = vrot.lane.b32.xlu0 %v601, 28
        %v1466 = vpop.permute.xlu0 %1465
        %1467 = vrot.lane.b32.xlu0 %v602, 28
        %v1468 = vpop.permute.xlu0 %1467
        %1469 = vrot.lane.b32.xlu0 %v603, 28
        %v1470 = vpop.permute.xlu0 %1469
        %1471 = vrot.lane.b32.xlu0 %v604, 28
        %v1472 = vpop.permute.xlu0 %1471
        %1473 = vrot.lane.b32.xlu0 %v605, 28
        %v1474 = vpop.permute.xlu0 %1473
        %1475 = vrot.lane.b32.xlu0 %v606, 28
        %v1476 = vpop.permute.xlu0 %1475
        %1477 = vrot.lane.b32.xlu0 %v607, 28
        %v1478 = vpop.permute.xlu0 %1477
        %1479 = vrot.lane.b32.xlu0 %v608, 28
        %v1480 = vpop.permute.xlu0 %1479
        %1481 = vrot.lane.b32.xlu0 %v609, 28
        %v1482 = vpop.permute.xlu0 %1481
        %1483 = vrot.lane.b32.xlu0 %v610, 28
        %v1484 = vpop.permute.xlu0 %1483
        %1485 = vrot.lane.b32.xlu0 %v611, 28
        %v1486 = vpop.permute.xlu0 %1485
        %1487 = vrot.lane.b32.xlu0 %v612, 28
        %v1488 = vpop.permute.xlu0 %1487
        %1489 = vrot.lane.b32.xlu0 %v613, 28
        %v1490 = vpop.permute.xlu0 %1489
        %1491 = vrot.lane.b32.xlu0 %v614, 28
        %v1492 = vpop.permute.xlu0 %1491
        %1493 = vrot.lane.b32.xlu0 %v615, 28
        %v1494 = vpop.permute.xlu0 %1493
        %1495 = vrot.lane.b32.xlu0 %v616, 28
        %v1496 = vpop.permute.xlu0 %1495
        %1497 = vrot.lane.b32.xlu0 %v617, 28
        %v1498 = vpop.permute.xlu0 %1497
        %1499 = vrot.lane.b32.xlu0 %v618, 28
        %v1500 = vpop.permute.xlu0 %1499
        %1501 = vrot.lane.b32.xlu0 %v619, 28
        %v1502 = vpop.permute.xlu0 %1501
        %1503 = vrot.lane.b32.xlu0 %v620, 28
        %v1504 = vpop.permute.xlu0 %1503
        %1505 = vrot.lane.b32.xlu0 %v621, 28
        %v1506 = vpop.permute.xlu0 %1505
        %1507 = vrot.lane.b32.xlu0 %v622, 28
        %v1508 = vpop.permute.xlu0 %1507
        %1509 = vrot.lane.b32.xlu0 %v623, 28
        %v1510 = vpop.permute.xlu0 %1509
        %1511 = vrot.lane.b32.xlu0 %v624, 28
        %v1512 = vpop.permute.xlu0 %1511
        %1513 = vrot.lane.b32.xlu0 %v625, 28
        %v1514 = vpop.permute.xlu0 %1513
        %1515 = vrot.lane.b32.xlu0 %v626, 28
        %v1516 = vpop.permute.xlu0 %1515
        %1517 = vrot.lane.b32.xlu0 %v627, 28
        %v1518 = vpop.permute.xlu0 %1517
        %1519 = vrot.lane.b32.xlu0 %v628, 28
        %v1520 = vpop.permute.xlu0 %1519
        %1521 = vrot.lane.b32.xlu0 %v629, 28
        %v1522 = vpop.permute.xlu0 %1521
        %1523 = vrot.lane.b32.xlu0 %v630, 28
        %v1524 = vpop.permute.xlu0 %1523
        %1525 = vrot.lane.b32.xlu0 %v631, 28
        %v1526 = vpop.permute.xlu0 %1525
        %1527 = vrot.lane.b32.xlu0 %v632, 28
        %v1528 = vpop.permute.xlu0 %1527
        %1593 = vrot.lane.b32.xlu0 %v633, 32
        %v1594 = vpop.permute.xlu0 %1593
        %1595 = vrot.lane.b32.xlu0 %v634, 32
        %v1596 = vpop.permute.xlu0 %1595
        %1597 = vrot.lane.b32.xlu0 %v635, 32
        %v1598 = vpop.permute.xlu0 %1597
        %1599 = vrot.lane.b32.xlu0 %v636, 32
        %v1600 = vpop.permute.xlu0 %1599
        %1601 = vrot.lane.b32.xlu0 %v637, 32
        %v1602 = vpop.permute.xlu0 %1601
        %1603 = vrot.lane.b32.xlu0 %v638, 32
        %v1604 = vpop.permute.xlu0 %1603
        %1605 = vrot.lane.b32.xlu0 %v639, 32
        %v1606 = vpop.permute.xlu0 %1605
        %1607 = vrot.lane.b32.xlu0 %v640, 32
        %v1608 = vpop.permute.xlu0 %1607
        %1609 = vrot.lane.b32.xlu0 %v641, 32
        %v1610 = vpop.permute.xlu0 %1609
        %1611 = vrot.lane.b32.xlu0 %v642, 32
        %v1612 = vpop.permute.xlu0 %1611
        %1613 = vrot.lane.b32.xlu0 %v643, 32
        %v1614 = vpop.permute.xlu0 %1613
        %1615 = vrot.lane.b32.xlu0 %v644, 32
        %v1616 = vpop.permute.xlu0 %1615
        %1617 = vrot.lane.b32.xlu0 %v645, 32
        %v1618 = vpop.permute.xlu0 %1617
        %1619 = vrot.lane.b32.xlu0 %v646, 32
        %v1620 = vpop.permute.xlu0 %1619
        %1621 = vrot.lane.b32.xlu0 %v647, 32
        %v1622 = vpop.permute.xlu0 %1621
        %1623 = vrot.lane.b32.xlu0 %v648, 32
        %v1624 = vpop.permute.xlu0 %1623
        %1625 = vrot.lane.b32.xlu0 %v649, 32
        %v1626 = vpop.permute.xlu0 %1625
        %1627 = vrot.lane.b32.xlu0 %v650, 32
        %v1628 = vpop.permute.xlu0 %1627
        %1629 = vrot.lane.b32.xlu0 %v651, 32
        %v1630 = vpop.permute.xlu0 %1629
        %1631 = vrot.lane.b32.xlu0 %v652, 32
        %v1632 = vpop.permute.xlu0 %1631
        %1633 = vrot.lane.b32.xlu0 %v653, 32
        %v1634 = vpop.permute.xlu0 %1633
        %1635 = vrot.lane.b32.xlu0 %v654, 32
        %v1636 = vpop.permute.xlu0 %1635
        %1637 = vrot.lane.b32.xlu0 %v655, 32
        %v1638 = vpop.permute.xlu0 %1637
        %1639 = vrot.lane.b32.xlu0 %v656, 32
        %v1640 = vpop.permute.xlu0 %1639
        %1641 = vrot.lane.b32.xlu0 %v657, 32
        %v1642 = vpop.permute.xlu0 %1641
        %1643 = vrot.lane.b32.xlu0 %v658, 32
        %v1644 = vpop.permute.xlu0 %1643
        %1645 = vrot.lane.b32.xlu0 %v659, 32
        %v1646 = vpop.permute.xlu0 %1645
        %1647 = vrot.lane.b32.xlu0 %v660, 32
        %v1648 = vpop.permute.xlu0 %1647
        %1649 = vrot.lane.b32.xlu0 %v661, 32
        %v1650 = vpop.permute.xlu0 %1649
        %1651 = vrot.lane.b32.xlu0 %v662, 32
        %v1652 = vpop.permute.xlu0 %1651
        %1653 = vrot.lane.b32.xlu0 %v663, 32
        %v1654 = vpop.permute.xlu0 %1653
        %1655 = vrot.lane.b32.xlu0 %v664, 32
        %v1656 = vpop.permute.xlu0 %1655
        %vm1689 = vcmask 31744
        %v1690 = vsel %vm1689, %v371, %v698
        %v1691 = vsel %vm1689, %v372, %v700
        %v1692 = vsel %vm1689, %v373, %v702
        %v1693 = vsel %vm1689, %v374, %v704
        %v1694 = vsel %vm1689, %v375, %v706
        %v1695 = vsel %vm1689, %v376, %v708
        %v1696 = vsel %vm1689, %v377, %v710
        %v1697 = vsel %vm1689, %v378, %v712
        %v1698 = vsel %vm1689, %v379, %v714
        %v1699 = vsel %vm1689, %v380, %v716
        %v1700 = vsel %vm1689, %v381, %v718
        %v1701 = vsel %vm1689, %v382, %v720
        %v1702 = vsel %vm1689, %v383, %v722
        %v1703 = vsel %vm1689, %v384, %v724
        %v1704 = vsel %vm1689, %v385, %v726
        %v1705 = vsel %vm1689, %v386, %v728
        %v1706 = vsel %vm1689, %v387, %v730
        %v1707 = vsel %vm1689, %v388, %v732
        %v1708 = vsel %vm1689, %v389, %v734
        %v1709 = vsel %vm1689, %v390, %v736
        %v1710 = vsel %vm1689, %v391, %v738
        %v1711 = vsel %vm1689, %v392, %v740
        %v1712 = vsel %vm1689, %v393, %v742
        %v1713 = vsel %vm1689, %v394, %v744
        %v1714 = vsel %vm1689, %v395, %v746
        %v1715 = vsel %vm1689, %v396, %v748
        %v1716 = vsel %vm1689, %v397, %v750
        %v1717 = vsel %vm1689, %v398, %v752
        %v1718 = vsel %vm1689, %v399, %v754
        %v1719 = vsel %vm1689, %v400, %v756
        %v1720 = vsel %vm1689, %v401, %v758
        %v1721 = vsel %vm1689, %v402, %v760
        %vm1722 = vcmask 64512
        %v1723 = vsel %vm1722, %v1690, %v826
        %v1724 = vsel %vm1722, %v1691, %v828
        %v1725 = vsel %vm1722, %v1692, %v830
        %v1726 = vsel %vm1722, %v1693, %v832
        %v1727 = vsel %vm1722, %v1694, %v834
        %v1728 = vsel %vm1722, %v1695, %v836
        %v1729 = vsel %vm1722, %v1696, %v838
        %v1730 = vsel %vm1722, %v1697, %v840
        %v1731 = vsel %vm1722, %v1698, %v842
        %v1732 = vsel %vm1722, %v1699, %v844
        %v1733 = vsel %vm1722, %v1700, %v846
        %v1734 = vsel %vm1722, %v1701, %v848
        %v1735 = vsel %vm1722, %v1702, %v850
        %v1736 = vsel %vm1722, %v1703, %v852
        %v1737 = vsel %vm1722, %v1704, %v854
        %v1738 = vsel %vm1722, %v1705, %v856
        %v1739 = vsel %vm1722, %v1706, %v858
        %v1740 = vsel %vm1722, %v1707, %v860
        %v1741 = vsel %vm1722, %v1708, %v862
        %v1742 = vsel %vm1722, %v1709, %v864
        %v1743 = vsel %vm1722, %v1710, %v866
        %v1744 = vsel %vm1722, %v1711, %v868
        %v1745 = vsel %vm1722, %v1712, %v870
        %v1746 = vsel %vm1722, %v1713, %v872
        %v1747 = vsel %vm1722, %v1714, %v874
        %v1748 = vsel %vm1722, %v1715, %v876
        %v1749 = vsel %vm1722, %v1716, %v878
        %v1750 = vsel %vm1722, %v1717, %v880
        %v1751 = vsel %vm1722, %v1718, %v882
        %v1752 = vsel %vm1722, %v1719, %v884
        %v1753 = vsel %vm1722, %v1720, %v886
        %v1754 = vsel %vm1722, %v1721, %v888
        %vm1755 = vcmask 97280
        %v1756 = vsel %vm1755, %v1723, %v954
        %v1757 = vsel %vm1755, %v1724, %v956
        %v1758 = vsel %vm1755, %v1725, %v958
        %v1759 = vsel %vm1755, %v1726, %v960
        %v1760 = vsel %vm1755, %v1727, %v962
        %v1761 = vsel %vm1755, %v1728, %v964
        %v1762 = vsel %vm1755, %v1729, %v966
        %v1763 = vsel %vm1755, %v1730, %v968
        %v1764 = vsel %vm1755, %v1731, %v970
        %v1765 = vsel %vm1755, %v1732, %v972
        %v1766 = vsel %vm1755, %v1733, %v974
        %v1767 = vsel %vm1755, %v1734, %v976
        %v1768 = vsel %vm1755, %v1735, %v978
        %v1769 = vsel %vm1755, %v1736, %v980
        %v1770 = vsel %vm1755, %v1737, %v982
        %v1771 = vsel %vm1755, %v1738, %v984
        %v1772 = vsel %vm1755, %v1739, %v986
        %v1773 = vsel %vm1755, %v1740, %v988
        %v1774 = vsel %vm1755, %v1741, %v990
        %v1775 = vsel %vm1755, %v1742, %v992
        %v1776 = vsel %vm1755, %v1743, %v994
        %v1777 = vsel %vm1755, %v1744, %v996
        %v1778 = vsel %vm1755, %v1745, %v998
        %v1779 = vsel %vm1755, %v1746, %v1000
        %v1780 = vsel %vm1755, %v1747, %v1002
        %v1781 = vsel %vm1755, %v1748, %v1004
        %v1782 = vsel %vm1755, %v1749, %v1006
        %v1783 = vsel %vm1755, %v1750, %v1008
        %v1784 = vsel %vm1755, %v1751, %v1010
        %v1785 = vsel %vm1755, %v1752, %v1012
        %v1786 = vsel %vm1755, %v1753, %v1014
        %v1787 = vsel %vm1755, %v1754, %v1016
        %vm1788 = vcmask 130048
        %v1789 = vsel %vm1788, %v1756, %v1082
        %v1790 = vsel %vm1788, %v1757, %v1084
        %v1791 = vsel %vm1788, %v1758, %v1086
        %v1792 = vsel %vm1788, %v1759, %v1088
        %v1793 = vsel %vm1788, %v1760, %v1090
        %v1794 = vsel %vm1788, %v1761, %v1092
        %v1795 = vsel %vm1788, %v1762, %v1094
        %v1796 = vsel %vm1788, %v1763, %v1096
        %v1797 = vsel %vm1788, %v1764, %v1098
        %v1798 = vsel %vm1788, %v1765, %v1100
        %v1799 = vsel %vm1788, %v1766, %v1102
        %v1800 = vsel %vm1788, %v1767, %v1104
        %v1801 = vsel %vm1788, %v1768, %v1106
        %v1802 = vsel %vm1788, %v1769, %v1108
        %v1803 = vsel %vm1788, %v1770, %v1110
        %v1804 = vsel %vm1788, %v1771, %v1112
        %v1805 = vsel %vm1788, %v1772, %v1114
        %v1806 = vsel %vm1788, %v1773, %v1116
        %v1807 = vsel %vm1788, %v1774, %v1118
        %v1808 = vsel %vm1788, %v1775, %v1120
        %v1809 = vsel %vm1788, %v1776, %v1122
        %v1810 = vsel %vm1788, %v1777, %v1124
        %v1811 = vsel %vm1788, %v1778, %v1126
        %v1812 = vsel %vm1788, %v1779, %v1128
        %v1813 = vsel %vm1788, %v1780, %v1130
        %v1814 = vsel %vm1788, %v1781, %v1132
        %v1815 = vsel %vm1788, %v1782, %v1134
        %v1816 = vsel %vm1788, %v1783, %v1136
        %v1817 = vsel %vm1788, %v1784, %v1138
        %v1818 = vsel %vm1788, %v1785, %v1140
        %v1819 = vsel %vm1788, %v1786, %v1142
        %v1820 = vsel %vm1788, %v1787, %v1144
        %vm1821 = vcmask 162816
        %v1822 = vsel %vm1821, %v1789, %v1210
        %v1823 = vsel %vm1821, %v1790, %v1212
        %v1824 = vsel %vm1821, %v1791, %v1214
        %v1825 = vsel %vm1821, %v1792, %v1216
        %v1826 = vsel %vm1821, %v1793, %v1218
        %v1827 = vsel %vm1821, %v1794, %v1220
        %v1828 = vsel %vm1821, %v1795, %v1222
        %v1829 = vsel %vm1821, %v1796, %v1224
        %v1830 = vsel %vm1821, %v1797, %v1226
        %v1831 = vsel %vm1821, %v1798, %v1228
        %v1832 = vsel %vm1821, %v1799, %v1230
        %v1833 = vsel %vm1821, %v1800, %v1232
        %v1834 = vsel %vm1821, %v1801, %v1234
        %v1835 = vsel %vm1821, %v1802, %v1236
        %v1836 = vsel %vm1821, %v1803, %v1238
        %v1837 = vsel %vm1821, %v1804, %v1240
        %v1838 = vsel %vm1821, %v1805, %v1242
        %v1839 = vsel %vm1821, %v1806, %v1244
        %v1840 = vsel %vm1821, %v1807, %v1246
        %v1841 = vsel %vm1821, %v1808, %v1248
        %v1842 = vsel %vm1821, %v1809, %v1250
        %v1843 = vsel %vm1821, %v1810, %v1252
        %v1844 = vsel %vm1821, %v1811, %v1254
        %v1845 = vsel %vm1821, %v1812, %v1256
        %v1846 = vsel %vm1821, %v1813, %v1258
        %v1847 = vsel %vm1821, %v1814, %v1260
        %v1848 = vsel %vm1821, %v1815, %v1262
        %v1849 = vsel %vm1821, %v1816, %v1264
        %v1850 = vsel %vm1821, %v1817, %v1266
        %v1851 = vsel %vm1821, %v1818, %v1268
        %v1852 = vsel %vm1821, %v1819, %v1270
        %v1853 = vsel %vm1821, %v1820, %v1272
        %vm1854 = vcmask 195584
        %v1855 = vsel %vm1854, %v1822, %v1338
        %v1856 = vsel %vm1854, %v1823, %v1340
        %v1857 = vsel %vm1854, %v1824, %v1342
        %v1858 = vsel %vm1854, %v1825, %v1344
        %v1859 = vsel %vm1854, %v1826, %v1346
        %v1860 = vsel %vm1854, %v1827, %v1348
        %v1861 = vsel %vm1854, %v1828, %v1350
        %v1862 = vsel %vm1854, %v1829, %v1352
        %v1863 = vsel %vm1854, %v1830, %v1354
        %v1864 = vsel %vm1854, %v1831, %v1356
        %v1865 = vsel %vm1854, %v1832, %v1358
        %v1866 = vsel %vm1854, %v1833, %v1360
        %v1867 = vsel %vm1854, %v1834, %v1362
        %v1868 = vsel %vm1854, %v1835, %v1364
        %v1869 = vsel %vm1854, %v1836, %v1366
        %v1870 = vsel %vm1854, %v1837, %v1368
        %v1871 = vsel %vm1854, %v1838, %v1370
        %v1872 = vsel %vm1854, %v1839, %v1372
        %v1873 = vsel %vm1854, %v1840, %v1374
        %v1874 = vsel %vm1854, %v1841, %v1376
        %v1875 = vsel %vm1854, %v1842, %v1378
        %v1876 = vsel %vm1854, %v1843, %v1380
        %v1877 = vsel %vm1854, %v1844, %v1382
        %v1878 = vsel %vm1854, %v1845, %v1384
        %v1879 = vsel %vm1854, %v1846, %v1386
        %v1880 = vsel %vm1854, %v1847, %v1388
        %v1881 = vsel %vm1854, %v1848, %v1390
        %v1882 = vsel %vm1854, %v1849, %v1392
        %v1883 = vsel %vm1854, %v1850, %v1394
        %v1884 = vsel %vm1854, %v1851, %v1396
        %v1885 = vsel %vm1854, %v1852, %v1398
        %v1886 = vsel %vm1854, %v1853, %v1400
        %vm1887 = vcmask 228352
        %v1888 = vsel %vm1887, %v1855, %v1466
        %v1889 = vsel %vm1887, %v1856, %v1468
        %v1890 = vsel %vm1887, %v1857, %v1470
        %v1891 = vsel %vm1887, %v1858, %v1472
        %v1892 = vsel %vm1887, %v1859, %v1474
        %v1893 = vsel %vm1887, %v1860, %v1476
        %v1894 = vsel %vm1887, %v1861, %v1478
        %v1895 = vsel %vm1887, %v1862, %v1480
        %v1896 = vsel %vm1887, %v1863, %v1482
        %v1897 = vsel %vm1887, %v1864, %v1484
        %v1898 = vsel %vm1887, %v1865, %v1486
        %v1899 = vsel %vm1887, %v1866, %v1488
        %v1900 = vsel %vm1887, %v1867, %v1490
        %v1901 = vsel %vm1887, %v1868, %v1492
        %v1902 = vsel %vm1887, %v1869, %v1494
        %v1903 = vsel %vm1887, %v1870, %v1496
        %v1904 = vsel %vm1887, %v1871, %v1498
        %v1905 = vsel %vm1887, %v1872, %v1500
        %v1906 = vsel %vm1887, %v1873, %v1502
        %v1907 = vsel %vm1887, %v1874, %v1504
        %v1908 = vsel %vm1887, %v1875, %v1506
        %v1909 = vsel %vm1887, %v1876, %v1508
        %v1910 = vsel %vm1887, %v1877, %v1510
        %v1911 = vsel %vm1887, %v1878, %v1512
        %v1912 = vsel %vm1887, %v1879, %v1514
        %v1913 = vsel %vm1887, %v1880, %v1516
        %v1914 = vsel %vm1887, %v1881, %v1518
        %v1915 = vsel %vm1887, %v1882, %v1520
        %v1916 = vsel %vm1887, %v1883, %v1522
        %v1917 = vsel %vm1887, %v1884, %v1524
        %v1918 = vsel %vm1887, %v1885, %v1526
        %v1919 = vsel %vm1887, %v1886, %v1528
        %vm1920 = vcmask 261120
        %v1921 = vsel %vm1920, %v1888, %v1594
        %v1922 = vsel %vm1920, %v1889, %v1596
        %v1923 = vsel %vm1920, %v1890, %v1598
        %v1924 = vsel %vm1920, %v1891, %v1600
        %v1925 = vsel %vm1920, %v1892, %v1602
        %v1926 = vsel %vm1920, %v1893, %v1604
        %v1927 = vsel %vm1920, %v1894, %v1606
        %v1928 = vsel %vm1920, %v1895, %v1608
        %v1929 = vsel %vm1920, %v1896, %v1610
        %v1930 = vsel %vm1920, %v1897, %v1612
        %v1931 = vsel %vm1920, %v1898, %v1614
        %v1932 = vsel %vm1920, %v1899, %v1616
        %v1933 = vsel %vm1920, %v1900, %v1618
        %v1934 = vsel %vm1920, %v1901, %v1620
        %v1935 = vsel %vm1920, %v1902, %v1622
        %v1936 = vsel %vm1920, %v1903, %v1624
        %v1937 = vsel %vm1920, %v1904, %v1626
        %v1938 = vsel %vm1920, %v1905, %v1628
        %v1939 = vsel %vm1920, %v1906, %v1630
        %v1940 = vsel %vm1920, %v1907, %v1632
        %v1941 = vsel %vm1920, %v1908, %v1634
        %v1942 = vsel %vm1920, %v1909, %v1636
        %v1943 = vsel %vm1920, %v1910, %v1638
        %v1944 = vsel %vm1920, %v1911, %v1640
        %v1945 = vsel %vm1920, %v1912, %v1642
        %v1946 = vsel %vm1920, %v1913, %v1644
        %v1947 = vsel %vm1920, %v1914, %v1646
        %v1948 = vsel %vm1920, %v1915, %v1648
        %v1949 = vsel %vm1920, %v1916, %v1650
        %v1950 = vsel %vm1920, %v1917, %v1652
        %v1951 = vsel %vm1920, %v1918, %v1654
        %v1952 = vsel %vm1920, %v1919, %v1656
        %v1953 = vld [vmem:[#allocation2] sm:$0xff]
        %v1954 = vld [vmem:[#allocation2 + $0x8] sm:$0xff]
        %v1955 = vld [vmem:[#allocation2 + $0x10] sm:$0xff]
        %v1956 = vld [vmem:[#allocation2 + $0x18] sm:$0xff]
        %v1957 = vld [vmem:[#allocation2 + $0x20] sm:$0xf]
        %vm1958 = vcmask 293888
        %v1960 = vsel %vm1958, %v1921, 0
        %v1963 = vsel %vm1958, %v1922, 0
        %v1966 = vsel %vm1958, %v1923, 0
        %v1969 = vsel %vm1958, %v1924, 0
        %v1972 = vsel %vm1958, %v1925, 0
        %v1975 = vsel %vm1958, %v1926, 0
        %v1978 = vsel %vm1958, %v1927, 0
        %v1981 = vsel %vm1958, %v1928, 0
        %v1984 = vsel %vm1958, %v1929, 0
        %v1987 = vsel %vm1958, %v1930, 0
        %v1990 = vsel %vm1958, %v1931, 0
        %v1993 = vsel %vm1958, %v1932, 0
        %v1996 = vsel %vm1958, %v1933, 0
        %v1999 = vsel %vm1958, %v1934, 0
        %v2002 = vsel %vm1958, %v1935, 0
        %v2005 = vsel %vm1958, %v1936, 0
        %v2008 = vsel %vm1958, %v1937, 0
        %v2011 = vsel %vm1958, %v1938, 0
        %v2014 = vsel %vm1958, %v1939, 0
        %v2017 = vsel %vm1958, %v1940, 0
        %v2020 = vsel %vm1958, %v1941, 0
        %v2023 = vsel %vm1958, %v1942, 0
        %v2026 = vsel %vm1958, %v1943, 0
        %v2029 = vsel %vm1958, %v1944, 0
        %v2032 = vsel %vm1958, %v1945, 0
        %v2035 = vsel %vm1958, %v1946, 0
        %v2038 = vsel %vm1958, %v1947, 0
        %v2041 = vsel %vm1958, %v1948, 0
        %v2044 = vsel %vm1958, %v1949, 0
        %v2047 = vsel %vm1958, %v1950, 0
        %v2050 = vsel %vm1958, %v1951, 0
        %v2053 = vsel %vm1958, %v1952, 0
        %vm2055 = vcmask 1043456
        %v2057 = vsel %vm2055, %v1957, 0
        %2059 = vmatprep.subr.mxu0 0.0
        %2060 = vmatpush1.msra.mxu0 %v1953
        %2061 = vmatprep.subr.mxu0 0.0
        %2062 = vmatpush1.msra.mxu0 %v1954
        %2063 = vmatprep.subr.mxu0 0.0
        %2064 = vmatpush1.msra.mxu0 %v1955
        %2065 = vmatprep.subr.mxu0 0.0
        %2066 = vmatpush1.msra.mxu0 %v1956
        %2067 = vmatprep.subr.mxu0 0.0
        %2068 = vmatpush1.msra.mxu0 %v2057
        %2069 = vmatprep.subr.mxu0 0.0
        %2070 = vmatpush1.msra.mxu0 0.0
        %2071 = vmatprep.subr.mxu0 0.0
        %2072 = vmatpush1.msra.mxu0 0.0
        %2073 = vmatprep.subr.mxu0 0.0
        %2074 = vmatpush1.msra.mxu0 0.0
        %2075 = vmatprep.subr.mxu0 0.0
        %2076 = vmatpush1.msra.mxu0 0.0
        %2077 = vmatprep.subr.mxu0 0.0
        %2078 = vmatpush1.msra.mxu0 0.0
        %2079 = vmatprep.subr.mxu0 0.0
        %2080 = vmatpush1.msra.mxu0 0.0
        %2081 = vmatprep.subr.mxu0 0.0
        %2082 = vmatpush1.msra.mxu0 0.0
        %2083 = vmatprep.subr.mxu0 0.0
        %2084 = vmatpush1.msra.mxu0 0.0
        %2085 = vmatprep.subr.mxu0 0.0
        %2086 = vmatpush1.msra.mxu0 0.0
        %2087 = vmatprep.subr.mxu0 0.0
        %2088 = vmatpush1.msra.mxu0 0.0
        %2089 = vmatprep.subr.mxu0 0.0
        %2090 = vmatpush1.msra.mxu0 0.0
        %2091 = vmatprep.subr.mxu0 0.0
        %2092 = vmatpush1.msra.mxu0 0.0
        %2093 = vmatprep.subr.mxu0 0.0
        %2094 = vmatpush1.msra.mxu0 0.0
        %2095 = vmatprep.subr.mxu0 0.0
        %2096 = vmatpush1.msra.mxu0 0.0
        %2097 = vmatprep.subr.mxu0 0.0
        %2098 = vmatpush1.msra.mxu0 0.0
        %2099 = vmatprep.subr.mxu0 0.0
        %2100 = vmatpush1.msra.mxu0 0.0
        %2101 = vmatprep.subr.mxu0 0.0
        %2102 = vmatpush1.msra.mxu0 0.0
        %2103 = vmatprep.subr.mxu0 0.0
        %2104 = vmatpush1.msra.mxu0 0.0
        %2105 = vmatprep.subr.mxu0 0.0
        %2106 = vmatpush1.msra.mxu0 0.0
        %2107 = vmatprep.subr.mxu0 0.0
        %2108 = vmatpush1.msra.mxu0 0.0
        %2109 = vmatprep.subr.mxu0 0.0
        %2110 = vmatpush1.msra.mxu0 0.0
        %2111 = vmatprep.subr.mxu0 0.0
        %2112 = vmatpush1.msra.mxu0 0.0
        %2113 = vmatprep.subr.mxu0 0.0
        %2114 = vmatpush1.msra.mxu0 0.0
        %2115 = vmatprep.subr.mxu0 0.0
        %2116 = vmatpush1.msra.mxu0 0.0
        %2117 = vmatprep.subr.mxu0 0.0
        %2118 = vmatpush1.msra.mxu0 0.0
        %2119 = vmatprep.subr.mxu0 0.0
        %2120 = vmatpush1.msra.mxu0 0.0
        %2121 = vmatprep.subr.mxu0 0.0
        %2122 = vmatpush1.msra.mxu0 0.0
        %2123 = vmatprep.mubr.f32.mxu0 0.0
        %2124 = vmatmul.mubr.f32.gmra.mrb[0].mxu0 %v1960
        %v2125 = vpop.f32.mrb[0].mxu0
        %v2126 = vadd.f32 0.0, %v2125
        %v2127 = vpop.f32.mrb[0].mxu0
        %2128 = vmatprep.mubr.f32.mxu0 0.0
        %2129 = vmatmul.mubr.f32.gmra.mrb[0].mxu0 %v1963
        %v2130 = vpop.f32.mrb[0].mxu0
        %v2131 = vadd.f32 0.0, %v2130
        %v2132 = vpop.f32.mrb[0].mxu0
        %2133 = vmatprep.mubr.f32.mxu0 0.0
        %2134 = vmatmul.mubr.f32.gmra.mrb[0].mxu0 %v1966
        %v2135 = vpop.f32.mrb[0].mxu0
        %v2136 = vadd.f32 0.0, %v2135
        %v2137 = vpop.f32.mrb[0].mxu0
        %2138 = vmatprep.mubr.f32.mxu0 0.0
        %2139 = vmatmul.mubr.f32.gmra.mrb[0].mxu0 %v1969
        %v2140 = vpop.f32.mrb[0].mxu0
        %v2141 = vadd.f32 0.0, %v2140
        %v2142 = vpop.f32.mrb[0].mxu0
        %2143 = vmatprep.mubr.f32.mxu0 0.0
        %2144 = vmatmul.mubr.f32.gmra.mrb[0].mxu0 %v1972
        %v2145 = vpop.f32.mrb[0].mxu0
        %v2146 = vadd.f32 0.0, %v2145
        %v2147 = vpop.f32.mrb[0].mxu0
        %2148 = vmatprep.mubr.f32.mxu0 0.0
        %2149 = vmatmul.mubr.f32.gmra.mrb[0].mxu0 %v1975
        %v2150 = vpop.f32.mrb[0].mxu0
        %v2151 = vadd.f32 0.0, %v2150
        %v2152 = vpop.f32.mrb[0].mxu0
        %2153 = vmatprep.mubr.f32.mxu0 0.0
        %2154 = vmatmul.mubr.f32.gmra.mrb[0].mxu0 %v1978
        %v2155 = vpop.f32.mrb[0].mxu0
        %v2156 = vadd.f32 0.0, %v2155
        %v2157 = vpop.f32.mrb[0].mxu0
        %2158 = vmatprep.mubr.f32.mxu0 0.0
        %2159 = vmatmul.mubr.f32.gmra.mrb[0].mxu0 %v1981
        %v2160 = vpop.f32.mrb[0].mxu0
        %v2161 = vadd.f32 0.0, %v2160
        %v2162 = vpop.f32.mrb[0].mxu0
        %2163 = vmatprep.mubr.f32.mxu0 0.0
        %2164 = vmatmul.mubr.f32.gmra.mrb[0].mxu0 %v1984
        %v2165 = vpop.f32.mrb[0].mxu0
        %v2166 = vadd.f32 0.0, %v2165
        %v2167 = vpop.f32.mrb[0].mxu0
        %2168 = vmatprep.mubr.f32.mxu0 0.0
        %2169 = vmatmul.mubr.f32.gmra.mrb[0].mxu0 %v1987
        %v2170 = vpop.f32.mrb[0].mxu0
        %v2171 = vadd.f32 0.0, %v2170
        %v2172 = vpop.f32.mrb[0].mxu0
        %2173 = vmatprep.mubr.f32.mxu0 0.0
        %2174 = vmatmul.mubr.f32.gmra.mrb[0].mxu0 %v1990
        %v2175 = vpop.f32.mrb[0].mxu0
        %v2176 = vadd.f32 0.0, %v2175
        %v2177 = vpop.f32.mrb[0].mxu0
        %2178 = vmatprep.mubr.f32.mxu0 0.0
        %2179 = vmatmul.mubr.f32.gmra.mrb[0].mxu0 %v1993
        %v2180 = vpop.f32.mrb[0].mxu0
        %v2181 = vadd.f32 0.0, %v2180
        %v2182 = vpop.f32.mrb[0].mxu0
        %2183 = vmatprep.mubr.f32.mxu0 0.0
        %2184 = vmatmul.mubr.f32.gmra.mrb[0].mxu0 %v1996
        %v2185 = vpop.f32.mrb[0].mxu0
        %v2186 = vadd.f32 0.0, %v2185
        %v2187 = vpop.f32.mrb[0].mxu0
        %2188 = vmatprep.mubr.f32.mxu0 0.0
        %2189 = vmatmul.mubr.f32.gmra.mrb[0].mxu0 %v1999
        %v2190 = vpop.f32.mrb[0].mxu0
        %v2191 = vadd.f32 0.0, %v2190
        %v2192 = vpop.f32.mrb[0].mxu0
        %2193 = vmatprep.mubr.f32.mxu0 0.0
        %2194 = vmatmul.mubr.f32.gmra.mrb[0].mxu0 %v2002
        %v2195 = vpop.f32.mrb[0].mxu0
        %v2196 = vadd.f32 0.0, %v2195
        %v2197 = vpop.f32.mrb[0].mxu0
        %2198 = vmatprep.mubr.f32.mxu0 0.0
        %2199 = vmatmul.mubr.f32.gmra.mrb[0].mxu0 %v2005
        %v2200 = vpop.f32.mrb[0].mxu0
        %v2201 = vadd.f32 0.0, %v2200
        %v2202 = vpop.f32.mrb[0].mxu0
        %2203 = vmatprep.mubr.f32.mxu0 0.0
        %2204 = vmatmul.mubr.f32.gmra.mrb[0].mxu0 %v2008
        %v2205 = vpop.f32.mrb[0].mxu0
        %v2206 = vadd.f32 0.0, %v2205
        %v2207 = vpop.f32.mrb[0].mxu0
        %2208 = vmatprep.mubr.f32.mxu0 0.0
        %2209 = vmatmul.mubr.f32.gmra.mrb[0].mxu0 %v2011
        %v2210 = vpop.f32.mrb[0].mxu0
        %v2211 = vadd.f32 0.0, %v2210
        %v2212 = vpop.f32.mrb[0].mxu0
        %2213 = vmatprep.mubr.f32.mxu0 0.0
        %2214 = vmatmul.mubr.f32.gmra.mrb[0].mxu0 %v2014
        %v2215 = vpop.f32.mrb[0].mxu0
        %v2216 = vadd.f32 0.0, %v2215
        %v2217 = vpop.f32.mrb[0].mxu0
        %2218 = vmatprep.mubr.f32.mxu0 0.0
        %2219 = vmatmul.mubr.f32.gmra.mrb[0].mxu0 %v2017
        %v2220 = vpop.f32.mrb[0].mxu0
        %v2221 = vadd.f32 0.0, %v2220
        %v2222 = vpop.f32.mrb[0].mxu0
        %2223 = vmatprep.mubr.f32.mxu0 0.0
        %2224 = vmatmul.mubr.f32.gmra.mrb[0].mxu0 %v2020
        %v2225 = vpop.f32.mrb[0].mxu0
        %v2226 = vadd.f32 0.0, %v2225
        %v2227 = vpop.f32.mrb[0].mxu0
        %2228 = vmatprep.mubr.f32.mxu0 0.0
        %2229 = vmatmul.mubr.f32.gmra.mrb[0].mxu0 %v2023
        %v2230 = vpop.f32.mrb[0].mxu0
        %v2231 = vadd.f32 0.0, %v2230
        %v2232 = vpop.f32.mrb[0].mxu0
        %2233 = vmatprep.mubr.f32.mxu0 0.0
        %2234 = vmatmul.mubr.f32.gmra.mrb[0].mxu0 %v2026
        %v2235 = vpop.f32.mrb[0].mxu0
        %v2236 = vadd.f32 0.0, %v2235
        %v2237 = vpop.f32.mrb[0].mxu0
        %2238 = vmatprep.mubr.f32.mxu0 0.0
        %2239 = vmatmul.mubr.f32.gmra.mrb[0].mxu0 %v2029
        %v2240 = vpop.f32.mrb[0].mxu0
        %v2241 = vadd.f32 0.0, %v2240
        %v2242 = vpop.f32.mrb[0].mxu0
        %2243 = vmatprep.mubr.f32.mxu0 0.0
        %2244 = vmatmul.mubr.f32.gmra.mrb[0].mxu0 %v2032
        %v2245 = vpop.f32.mrb[0].mxu0
        %v2246 = vadd.f32 0.0, %v2245
        %v2247 = vpop.f32.mrb[0].mxu0
        %2248 = vmatprep.mubr.f32.mxu0 0.0
        %2249 = vmatmul.mubr.f32.gmra.mrb[0].mxu0 %v2035
        %v2250 = vpop.f32.mrb[0].mxu0
        %v2251 = vadd.f32 0.0, %v2250
        %v2252 = vpop.f32.mrb[0].mxu0
        %2253 = vmatprep.mubr.f32.mxu0 0.0
        %2254 = vmatmul.mubr.f32.gmra.mrb[0].mxu0 %v2038
        %v2255 = vpop.f32.mrb[0].mxu0
        %v2256 = vadd.f32 0.0, %v2255
        %v2257 = vpop.f32.mrb[0].mxu0
        %2258 = vmatprep.mubr.f32.mxu0 0.0
        %2259 = vmatmul.mubr.f32.gmra.mrb[0].mxu0 %v2041
        %v2260 = vpop.f32.mrb[0].mxu0
        %v2261 = vadd.f32 0.0, %v2260
        %v2262 = vpop.f32.mrb[0].mxu0
        %2263 = vmatprep.mubr.f32.mxu0 0.0
        %2264 = vmatmul.mubr.f32.gmra.mrb[0].mxu0 %v2044
        %v2265 = vpop.f32.mrb[0].mxu0
        %v2266 = vadd.f32 0.0, %v2265
        %v2267 = vpop.f32.mrb[0].mxu0
        %2268 = vmatprep.mubr.f32.mxu0 0.0
        %2269 = vmatmul.mubr.f32.gmra.mrb[0].mxu0 %v2047
        %v2270 = vpop.f32.mrb[0].mxu0
        %v2271 = vadd.f32 0.0, %v2270
        %v2272 = vpop.f32.mrb[0].mxu0
        %2273 = vmatprep.mubr.f32.mxu0 0.0
        %2274 = vmatmul.mubr.f32.gmra.mrb[0].mxu0 %v2050
        %v2275 = vpop.f32.mrb[0].mxu0
        %v2276 = vadd.f32 0.0, %v2275
        %v2277 = vpop.f32.mrb[0].mxu0
        %2278 = vmatprep.mubr.f32.mxu0 0.0
        %2279 = vmatmul.mubr.f32.gmra.mrb[0].mxu0 %v2053
        %v2280 = vpop.f32.mrb[0].mxu0
        %v2281 = vadd.f32 0.0, %v2280
        %v2282 = vpop.f32.mrb[0].mxu0
        %2283 = vdwg.mxu0
        %2284 = vst.msk [vmem:[%s254] sm:$0xff] %vm1722, %v2126
        %2285 = vst.msk [vmem:[%s254 + $0x8] sm:$0xff] %vm1722, %v2131
        %2286 = vst.msk [vmem:[%s254 + $0x10] sm:$0xff] %vm1722, %v2136
        %2287 = vst.msk [vmem:[%s254 + $0x18] sm:$0xff] %vm1722, %v2141
        %2288 = vst.msk [vmem:[%s254 + $0x20] sm:$0xff] %vm1722, %v2146
        %2289 = vst.msk [vmem:[%s254 + $0x28] sm:$0xff] %vm1722, %v2151
        %2290 = vst.msk [vmem:[%s254 + $0x30] sm:$0xff] %vm1722, %v2156
        %2291 = vst.msk [vmem:[%s254 + $0x38] sm:$0xff] %vm1722, %v2161
        %2292 = vst.msk [vmem:[%s254 + $0x40] sm:$0xff] %vm1722, %v2166
        %2293 = vst.msk [vmem:[%s254 + $0x48] sm:$0xff] %vm1722, %v2171
        %2294 = vst.msk [vmem:[%s254 + $0x50] sm:$0xff] %vm1722, %v2176
        %2295 = vst.msk [vmem:[%s254 + $0x58] sm:$0xff] %vm1722, %v2181
        %2296 = vst.msk [vmem:[%s254 + $0x60] sm:$0xff] %vm1722, %v2186
        %2297 = vst.msk [vmem:[%s254 + $0x68] sm:$0xff] %vm1722, %v2191
        %2298 = vst.msk [vmem:[%s254 + $0x70] sm:$0xff] %vm1722, %v2196
        %2299 = vst.msk [vmem:[%s254 + $0x78] sm:$0xff] %vm1722, %v2201
        %2300 = vst.msk [vmem:[%s254 + $0x80] sm:$0xff] %vm1722, %v2206
        %2301 = vst.msk [vmem:[%s254 + $0x88] sm:$0xff] %vm1722, %v2211
        %2302 = vst.msk [vmem:[%s254 + $0x90] sm:$0xff] %vm1722, %v2216
        %2303 = vst.msk [vmem:[%s254 + $0x98] sm:$0xff] %vm1722, %v2221
        %2304 = vst.msk [vmem:[%s254 + $0xa0] sm:$0xff] %vm1722, %v2226
        %2305 = vst.msk [vmem:[%s254 + $0xa8] sm:$0xff] %vm1722, %v2231
        %2306 = vst.msk [vmem:[%s254 + $0xb0] sm:$0xff] %vm1722, %v2236
        %2307 = vst.msk [vmem:[%s254 + $0xb8] sm:$0xff] %vm1722, %v2241
        %2308 = vst.msk [vmem:[%s254 + $0xc0] sm:$0xff] %vm1722, %v2246
        %2309 = vst.msk [vmem:[%s254 + $0xc8] sm:$0xff] %vm1722, %v2251
        %2310 = vst.msk [vmem:[%s254 + $0xd0] sm:$0xff] %vm1722, %v2256
        %2311 = vst.msk [vmem:[%s254 + $0xd8] sm:$0xff] %vm1722, %v2261
        %2312 = vst.msk [vmem:[%s254 + $0xe0] sm:$0xff] %vm1722, %v2266
        %2313 = vst.msk [vmem:[%s254 + $0xe8] sm:$0xff] %vm1722, %v2271
        %2314 = vst.msk [vmem:[%s254 + $0xf0] sm:$0xff] %vm1722, %v2276
        %2315 = vst.msk [vmem:[%s254 + $0xf8] sm:$0xff] %vm1722, %v2281
        %s2316 = sand.u32 %s116, 1
        %s2317 = scalar_lea.sflag [#allocation5], %s2316
        %s2318 = sand.u32 %s116, 1
        %s2319 = smul.addr %s2318, 256
        %s2320 = scalar_lea.vmem [#allocation9], %s2319
        // Predicated region
        $region49: #{tpu_custom_call.1} parent=31 // pred_check
          %p2321 = pneg %p126
        $region50: #{tpu_custom_call.1} parent=31 // pred_check_branch
          %2323 = sbr.rel (%p2321) target = $region52
        $region51: #{tpu_custom_call.1} parent=31 // pred_region
          %s2324 = smul.u32 32, %s26
          %s2326 = ssub.s32 4096, 4096
          %2327 = vsyncadd %s2317, %s2326
          %s2328 = smul.addr %s25, 32
          %s2329 = sadd.s32 %s2324, %s2328
          %s2330 = smul.addr %s2329, 128
          %s2331 = scalar_lea.hbm %s3, %s2330
          %s2332 = sshll.u32 %s2320, 4
          %s2333 = int_to_ptr.vmem [resolvable:$true] %s2332
          %2338 = dma.vmem_to_hbm [thread:$0]  %s2333, 4096, %s2331, %s2317, 128, 128, 8
        $region52: #{tpu_custom_call.1} parent=31 // pred_fallthru
          _
      $region32: #{tpu_custom_call.1} parent=5 // pred_fallthru
        _
      %p2339 = scmp.le.s32.totalorder 2, %s16
      // Predicated region
      $region53: #{tpu_custom_call.1} parent=5 // pred_check
        %p2340 = pneg %p2339
      $region54: #{tpu_custom_call.1} parent=5 // pred_check_branch
        %2342 = sbr.rel (%p2340) target = $region56
      $region55: #{tpu_custom_call.1} parent=5 // pred_region
        %s2343 = ssub.s32 %s16, 2
        // Predicated region
        $region57: #{tpu_custom_call.1} parent=55 // pred_check
          %p2344 = pneg %p132
        $region58: #{tpu_custom_call.1} parent=55 // pred_check_branch
          %2346 = sbr.rel (%p2344) target = $region60
        $region59: #{tpu_custom_call.1} parent=55 // pred_region
          %s2347 = sand.u32 %s117, 1
          %s2348 = scalar_lea.sflag [#allocation5], %s2347
          %s2349 = sand.u32 %s117, 1
          %s2350 = smul.addr %s2349, 256
          %s2351 = scalar_lea.vmem [#allocation9], %s2350
          %2352 = dma.done %s2348, 4096
        $region60: #{tpu_custom_call.1} parent=55 // pred_fallthru
          _
      $region56: #{tpu_custom_call.1} parent=5 // pred_fallthru
        _
    $region6: #{tpu_custom_call.1} parent=1 // loop_footer
      %s20 = sadd.s32 1, %s16
    $region7: #{tpu_custom_call.1} parent=1 // loop_footer_branch
      %15 = sbr.rel target = $region3
    $region8: #{tpu_custom_call.1} parent=1 // loop_exit
      _
    %2353 = vsyncpa [#allocation4], 1
    %s2354 = scalar_lea.sflag [#allocation4], 1
    %2355 = vsyncpa %s2354, 1
    %2356 = vsyncpa [#allocation7], 1
    %2357 = vsyncpa [#allocation5], 1
    %s2358 = scalar_lea.sflag [#allocation5], 1
    %2359 = vsyncpa %s2358, 1

</llo_original>
